<compile_context>
chip_gen: v5e
topology: v5e:2x2
jax: 0.10.0
libtpu: 0.0.40
codegen_flags: <defaults>
</compile_context>

<pallas_src>
import jax
import jax.numpy as jnp
from jax.experimental import pallas as pl
from jax.experimental.pallas import tpu as pltpu


def _make_recon_kernel(n, b, n_layers):
    """Fused kernel: n_layers-deep GRU + final Linear, one invocation, no grid.

    Ref order (inputs): x (n*b, in_dim) time-major flattened,
                        per layer: wi (in_l, 3h), bi (1, 3h), wh (h, 3h), bhn (1, h),
                        w_fc (h, out), b_fc (1, out)
    Output: out (n*b, out_dim) time-major flattened (one consolidated store).
    Scratch: h_scr (n*b, hid) -- current layer's hidden states over all t.
    """

    def kernel(*refs):
        x_ref = refs[0]
        layers = []
        idx = 1
        for _ in range(n_layers):
            layers.append(tuple(refs[idx:idx + 4]))       # (wi, bi, wh, bhn)
            idx += 4
        wfc_ref, bfc_ref = refs[idx], refs[idx + 1]
        out_ref = refs[idx + 2]
        h_scr = refs[idx + 3]

        hid = layers[0][2].shape[0]                        # wh: (hid, 3*hid)
        nb = n * b

        x_in = x_ref[...]                                  # (n*b, in_dim) layer input
        for (wi_ref, bi_ref, wh_ref, bhn_ref) in layers:
            wi = wi_ref[...]
            wh = wh_ref[...]
            # Hoisted broadcasts: done once per layer, reused by every unrolled step.
            bi_b = jnp.broadcast_to(bi_ref[...], (nb, 3 * hid))
            bhn_b = jnp.broadcast_to(bhn_ref[...], (b, hid))

            # Layer-wide input projection: ONE matmul, off the serial recurrence.
            # bi already holds [b_ir+b_hr | b_iz+b_hz | b_in].
            gx_all = jnp.dot(x_in, wi, preferred_element_type=jnp.float32) + bi_b

            h_prev = jnp.zeros((b, hid), jnp.float32)
            # window = 8 -> full unroll with static row offsets (equivalent to
            # lax.fori_loop(..., unroll=True) but with purely static slicing).
            for t in range(n):
                gx = gx_all[t * b:(t + 1) * b, :]          # (b, 3h)
                gh = jnp.dot(h_prev, wh, preferred_element_type=jnp.float32)
                # Fused r|z sigmoid: one EUP call over 2h lanes.
                rz = jax.nn.sigmoid(gx[:, :2 * hid] + gh[:, :2 * hid])
                r = rz[:, :hid]
                z = rz[:, hid:]
                ng = jnp.tanh(gx[:, 2 * hid:] + r * (gh[:, 2 * hid:] + bhn_b))
                h_prev = (1.0 - z) * ng + z * h_prev
                h_scr[t * b:(t + 1) * b, :] = h_prev
            x_in = h_scr[...]                              # next layer input (n*b, hid)

        # Post-recurrence fused Linear: one matmul + one consolidated store.
        wfc = wfc_ref[...]
        bfc_b = jnp.broadcast_to(bfc_ref[...], (nb, wfc.shape[1]))
        out_ref[...] = (jnp.dot(x_in, wfc, preferred_element_type=jnp.float32)
                        + bfc_b).astype(out_ref.dtype)

    return kernel


def reconstruction_forward(x, params, window_size):
    """ReconstructionModel.forward (eval semantics).

    x: (b, n, k) float32.  Requires n*k == in_dim of the decoder GRU.
    params: (gru_layers, (w_fc, b_fc)); see init_params.
    returns: (b, window_size, out_dim) float32.
    """
    gru_layers, (w_fc, b_fc) = params
    b = x.shape[0]

    # h_end_rep = x.repeat_interleave(window, dim=1).view(b, window, -1)
    h_end_rep = jnp.repeat(x, window_size, axis=1).reshape(b, window_size, -1)

    n = window_size
    in_dim = h_end_rep.shape[-1]
    wi0 = gru_layers[0][0]
    assert in_dim == wi0.shape[0], (in_dim, wi0.shape)
    hid = gru_layers[0][2].shape[0]
    out_dim = w_fc.shape[1]
    n_layers = len(gru_layers)

    # Time-major flattened (n*b, in_dim): row = t*b + batch. The layer-0 input
    # projection happens inside the kernel (no widened gx HBM round trip).
    x_flat = jnp.transpose(h_end_rep, (1, 0, 2)).reshape(n * b, in_dim)
    x_flat = x_flat.astype(jnp.float32)

    operands = [x_flat]
    for (wi, bi, wh, bhn) in gru_layers:
        operands += [wi, bi, wh, bhn]
    operands += [w_fc, b_fc]

    # Advisory cost for XLA's scheduler around the custom call.
    flops = 2 * n * b * (in_dim * 3 * hid
                         + (n_layers - 1) * hid * 3 * hid
                         + n_layers * hid * 3 * hid
                         + hid * out_dim)
    transcendentals = 3 * n * b * hid * n_layers
    bytes_accessed = 4 * (sum(int(o.size) for o in operands) + n * b * out_dim)
    cost = pl.CostEstimate(flops=int(flops),
                           transcendentals=int(transcendentals),
                           bytes_accessed=int(bytes_accessed))

    vmem_spec = pl.BlockSpec(memory_space=pltpu.MemorySpace.VMEM)
    out_flat = pl.pallas_call(
        _make_recon_kernel(n, b, n_layers),
        out_shape=jax.ShapeDtypeStruct((n * b, out_dim), jnp.float32),
        in_specs=[vmem_spec] * len(operands),
        out_specs=vmem_spec,
        scratch_shapes=[pltpu.VMEM((n * b, hid), jnp.float32)],
        cost_estimate=cost,
    )(*operands)

    # (n*b, out) -> (n, b, out) -> (b, window, out)
    return jnp.transpose(out_flat.reshape(n, b, out_dim), (1, 0, 2))


def reconstruction_reference(x, params, window_size):
    """Pure-JAX reference with identical (merged-bias) parametrization."""
    gru_layers, (w_fc, b_fc) = params
    b = x.shape[0]
    seq = jnp.repeat(x, window_size, axis=1).reshape(b, window_size, -1)
    seq = seq.astype(jnp.float32)
    for (wi, bi, wh, bhn) in gru_layers:
        hid = wh.shape[0]
        h_t = jnp.zeros((b, hid), jnp.float32)
        outs = []
        for t in range(window_size):
            gx = seq[:, t, :] @ wi + bi
            gh = h_t @ wh
            r = jax.nn.sigmoid(gx[:, :hid] + gh[:, :hid])
            z = jax.nn.sigmoid(gx[:, hid:2 * hid] + gh[:, hid:2 * hid])
            ng = jnp.tanh(gx[:, 2 * hid:] + r * (gh[:, 2 * hid:] + bhn))
            h_t = (1.0 - z) * ng + z * h_t
            outs.append(h_t)
        seq = jnp.stack(outs, axis=1)
    return seq @ w_fc + b_fc


def init_params(key, in_dim, hid_dim, out_dim, n_layers):
    """Deterministic init matching nn.GRU / nn.Linear shapes, U(-1/sqrt(h), 1/sqrt(h)).

    Stored gate-fused and pre-transposed for right-multiplication:
      wi: (layer_in, 3*hid) = [W_ir|W_iz|W_in]^T,  wh: (hid, 3*hid) = [W_hr|W_hz|W_hn]^T
      bi_merged: (1, 3*hid) = [b_ir+b_hr | b_iz+b_hz | b_in],  bhn: (1, hid)
    Layer tuple order: (wi, bi_merged, wh, bhn).
    """
    bound = 1.0 / jnp.sqrt(jnp.float32(hid_dim))

    def u(k, shape):
        return jax.random.uniform(k, shape, jnp.float32, minval=-bound, maxval=bound)

    gru_layers = []
    for layer in range(n_layers):
        layer_in = in_dim if layer == 0 else hid_dim
        keys = jax.random.split(jax.random.fold_in(key, layer), 4)
        wi = u(keys[0], (layer_in, 3 * hid_dim))
        wh = u(keys[1], (hid_dim, 3 * hid_dim))
        bi = u(keys[2], (1, 3 * hid_dim))
        bh = u(keys[3], (1, 3 * hid_dim))
        # Pre-sum mergeable biases (r, z); b_hn stays separate (inside r*(...)).
        bi_merged = bi + jnp.concatenate(
            [bh[:, :2 * hid_dim], jnp.zeros((1, hid_dim), jnp.float32)], axis=1)
        bhn = bh[:, 2 * hid_dim:]
        gru_layers.append((wi, bi_merged, wh, bhn))

    kfc = jax.random.fold_in(key, 1000)
    k1, k2 = jax.random.split(kfc)
    w_fc = u(k1, (hid_dim, out_dim))
    b_fc = u(k2, (1, out_dim))
    return gru_layers, (w_fc, b_fc)


if __name__ == "__main__":
    # ReconstructionModel(window_size=8, in_dim=32, hid_dim=32, out_dim=4,
    #                     n_layers=2, dropout=0.3)  -- dropout is a no-op in eval.
    batch, n, k = 2, 8, 4
    window_size = 8
    in_dim = n * k          # repeat_interleave + view gives last dim n*k == GRU in_dim
    hid_dim = 32
    out_dim = 4
    n_layers = 2

    key = jax.random.PRNGKey(0)
    kx, kp = jax.random.split(key)
    x = jax.random.normal(kx, (batch, n, k), dtype=jnp.float32)
    params = init_params(kp, in_dim, hid_dim, out_dim, n_layers)

    @jax.jit
    def fwd(inp):
        return reconstruction_forward(inp, params, window_size)

    out = jax.block_until_ready(fwd(x))
    assert out.shape == (batch, window_size, out_dim), out.shape
    assert bool(jnp.all(jnp.isfinite(out)))

    ref = reconstruction_reference(x, params, window_size)
    assert bool(jnp.allclose(out, ref, atol=1e-2, rtol=1e-2)), \
        float(jnp.max(jnp.abs(out - ref)))

    print("KERNEL_OK")
</pallas_src>

<mosaic_0001>
module attributes {stable_mosaic.version = 11 : i64} {
  func.func @kernel(%arg0: memref<16x32xf32, #tpu.memory_space<vmem>>, %arg1: memref<32x96xf32, #tpu.memory_space<vmem>>, %arg2: memref<1x96xf32, #tpu.memory_space<vmem>>, %arg3: memref<32x96xf32, #tpu.memory_space<vmem>>, %arg4: memref<1x32xf32, #tpu.memory_space<vmem>>, %arg5: memref<32x96xf32, #tpu.memory_space<vmem>>, %arg6: memref<1x96xf32, #tpu.memory_space<vmem>>, %arg7: memref<32x96xf32, #tpu.memory_space<vmem>>, %arg8: memref<1x32xf32, #tpu.memory_space<vmem>>, %arg9: memref<32x4xf32, #tpu.memory_space<vmem>>, %arg10: memref<1x4xf32, #tpu.memory_space<vmem>>, %arg11: memref<16x4xf32, #tpu.memory_space<vmem>>, %arg12: memref<16x32xf32, #tpu.memory_space<vmem>>) attributes {dimension_semantics = [], scalar_prefetch = 0 : i64, scratch_operands = 1 : i64, tpu.core_type = #tpu.core_type<tc>} {
    %c0 = arith.constant 0 : index
    %c0_0 = arith.constant 0 : index
    %0 = vector.load %arg0[%c0, %c0_0] : memref<16x32xf32, #tpu.memory_space<vmem>>, vector<16x32xf32>
    %c0_1 = arith.constant 0 : index
    %c0_2 = arith.constant 0 : index
    %1 = vector.load %arg1[%c0_1, %c0_2] : memref<32x96xf32, #tpu.memory_space<vmem>>, vector<32x96xf32>
    %c0_3 = arith.constant 0 : index
    %c0_4 = arith.constant 0 : index
    %2 = vector.load %arg3[%c0_3, %c0_4] : memref<32x96xf32, #tpu.memory_space<vmem>>, vector<32x96xf32>
    %c0_5 = arith.constant 0 : index
    %c0_6 = arith.constant 0 : index
    %3 = vector.load %arg2[%c0_5, %c0_6] : memref<1x96xf32, #tpu.memory_space<vmem>>, vector<1x96xf32>
    %4 = vector.shape_cast %3 : vector<1x96xf32> to vector<1x96xf32>
    %5 = vector.broadcast %4 : vector<1x96xf32> to vector<16x96xf32>
    %c0_7 = arith.constant 0 : index
    %c0_8 = arith.constant 0 : index
    %6 = vector.load %arg4[%c0_7, %c0_8] : memref<1x32xf32, #tpu.memory_space<vmem>>, vector<1x32xf32>
    %7 = vector.shape_cast %6 : vector<1x32xf32> to vector<1x32xf32>
    %8 = vector.broadcast %7 : vector<1x32xf32> to vector<2x32xf32>
    %cst = arith.constant dense<0.000000e+00> : vector<16x96xf32>
    %9 = tpu.matmul %0, %1, %cst {dimension_numbers = #tpu.dot_dimension_numbers<[1], [0], [0], [1], [0, 0, 1, 1], [], []>} : vector<16x32xf32>, vector<32x96xf32>, vector<16x96xf32> -> vector<16x96xf32>
    %10 = arith.addf %9, %5 : vector<16x96xf32>
    %cst_9 = arith.constant 0.000000e+00 : f32
    %11 = vector.broadcast %cst_9 : f32 to vector<2x32xf32>
    %12 = vector.extract_strided_slice %10 {offsets = [0, 0], sizes = [2, 96], strides = [1, 1]} : vector<16x96xf32> to vector<2x96xf32>
    %cst_10 = arith.constant dense<0.000000e+00> : vector<2x96xf32>
    %13 = tpu.matmul %11, %2, %cst_10 {dimension_numbers = #tpu.dot_dimension_numbers<[1], [0], [0], [1], [0, 0, 1, 1], [], []>} : vector<2x32xf32>, vector<32x96xf32>, vector<2x96xf32> -> vector<2x96xf32>
    %14 = vector.extract_strided_slice %12 {offsets = [0, 0], sizes = [2, 64], strides = [1, 1]} : vector<2x96xf32> to vector<2x64xf32>
    %15 = vector.extract_strided_slice %13 {offsets = [0, 0], sizes = [2, 64], strides = [1, 1]} : vector<2x96xf32> to vector<2x64xf32>
    %16 = arith.addf %14, %15 : vector<2x64xf32>
    %17 = arith.negf %16 : vector<2x64xf32>
    %18 = math.exp %17 : vector<2x64xf32>
    %cst_11 = arith.constant 1.000000e+00 : f32
    %19 = vector.broadcast %cst_11 : f32 to vector<2x64xf32>
    %20 = arith.addf %19, %18 : vector<2x64xf32>
    %21 = arith.divf %19, %20 : vector<2x64xf32>
    %22 = vector.extract_strided_slice %21 {offsets = [0, 0], sizes = [2, 32], strides = [1, 1]} : vector<2x64xf32> to vector<2x32xf32>
    %23 = vector.extract_strided_slice %21 {offsets = [0, 32], sizes = [2, 32], strides = [1, 1]} : vector<2x64xf32> to vector<2x32xf32>
    %24 = vector.extract_strided_slice %12 {offsets = [0, 64], sizes = [2, 32], strides = [1, 1]} : vector<2x96xf32> to vector<2x32xf32>
    %25 = vector.extract_strided_slice %13 {offsets = [0, 64], sizes = [2, 32], strides = [1, 1]} : vector<2x96xf32> to vector<2x32xf32>
    %26 = arith.addf %25, %8 : vector<2x32xf32>
    %27 = arith.mulf %22, %26 : vector<2x32xf32>
    %28 = arith.addf %24, %27 : vector<2x32xf32>
    %29 = math.tanh %28 : vector<2x32xf32>
    %cst_12 = arith.constant 1.000000e+00 : f32
    %30 = vector.broadcast %cst_12 : f32 to vector<2x32xf32>
    %31 = arith.subf %30, %23 : vector<2x32xf32>
    %32 = arith.mulf %31, %29 : vector<2x32xf32>
    %33 = arith.mulf %23, %11 : vector<2x32xf32>
    %34 = arith.addf %32, %33 : vector<2x32xf32>
    %c0_13 = arith.constant 0 : index
    %c0_14 = arith.constant 0 : index
    %35 = vector.load %arg12[%c0_13, %c0_14] : memref<16x32xf32, #tpu.memory_space<vmem>>, vector<2x32xf32>
    tpu.vector_store %arg12[%c0_13, %c0_14], %34 {strides = array<i32>} : memref<16x32xf32, #tpu.memory_space<vmem>>, vector<2x32xf32>,
    %36 = vector.extract_strided_slice %10 {offsets = [2, 0], sizes = [2, 96], strides = [1, 1]} : vector<16x96xf32> to vector<2x96xf32>
    %cst_15 = arith.constant dense<0.000000e+00> : vector<2x96xf32>
    %37 = tpu.matmul %34, %2, %cst_15 {dimension_numbers = #tpu.dot_dimension_numbers<[1], [0], [0], [1], [0, 0, 1, 1], [], []>} : vector<2x32xf32>, vector<32x96xf32>, vector<2x96xf32> -> vector<2x96xf32>
    %38 = vector.extract_strided_slice %36 {offsets = [0, 0], sizes = [2, 64], strides = [1, 1]} : vector<2x96xf32> to vector<2x64xf32>
    %39 = vector.extract_strided_slice %37 {offsets = [0, 0], sizes = [2, 64], strides = [1, 1]} : vector<2x96xf32> to vector<2x64xf32>
    %40 = arith.addf %38, %39 : vector<2x64xf32>
    %41 = arith.negf %40 : vector<2x64xf32>
    %42 = math.exp %41 : vector<2x64xf32>
    %cst_16 = arith.constant 1.000000e+00 : f32
    %43 = vector.broadcast %cst_16 : f32 to vector<2x64xf32>
    %44 = arith.addf %43, %42 : vector<2x64xf32>
    %45 = arith.divf %43, %44 : vector<2x64xf32>
    %46 = vector.extract_strided_slice %45 {offsets = [0, 0], sizes = [2, 32], strides = [1, 1]} : vector<2x64xf32> to vector<2x32xf32>
    %47 = vector.extract_strided_slice %45 {offsets = [0, 32], sizes = [2, 32], strides = [1, 1]} : vector<2x64xf32> to vector<2x32xf32>
    %48 = vector.extract_strided_slice %36 {offsets = [0, 64], sizes = [2, 32], strides = [1, 1]} : vector<2x96xf32> to vector<2x32xf32>
    %49 = vector.extract_strided_slice %37 {offsets = [0, 64], sizes = [2, 32], strides = [1, 1]} : vector<2x96xf32> to vector<2x32xf32>
    %50 = arith.addf %49, %8 : vector<2x32xf32>
    %51 = arith.mulf %46, %50 : vector<2x32xf32>
    %52 = arith.addf %48, %51 : vector<2x32xf32>
    %53 = math.tanh %52 : vector<2x32xf32>
    %cst_17 = arith.constant 1.000000e+00 : f32
    %54 = vector.broadcast %cst_17 : f32 to vector<2x32xf32>
    %55 = arith.subf %54, %47 : vector<2x32xf32>
    %56 = arith.mulf %55, %53 : vector<2x32xf32>
    %57 = arith.mulf %47, %34 : vector<2x32xf32>
    %58 = arith.addf %56, %57 : vector<2x32xf32>
    %c2 = arith.constant 2 : index
    %c0_18 = arith.constant 0 : index
    %59 = vector.load %arg12[%c2, %c0_18] : memref<16x32xf32, #tpu.memory_space<vmem>>, vector<2x32xf32>
    tpu.vector_store %arg12[%c2, %c0_18], %58 {strides = array<i32>} : memref<16x32xf32, #tpu.memory_space<vmem>>, vector<2x32xf32>,
    %60 = vector.extract_strided_slice %10 {offsets = [4, 0], sizes = [2, 96], strides = [1, 1]} : vector<16x96xf32> to vector<2x96xf32>
    %cst_19 = arith.constant dense<0.000000e+00> : vector<2x96xf32>
    %61 = tpu.matmul %58, %2, %cst_19 {dimension_numbers = #tpu.dot_dimension_numbers<[1], [0], [0], [1], [0, 0, 1, 1], [], []>} : vector<2x32xf32>, vector<32x96xf32>, vector<2x96xf32> -> vector<2x96xf32>
    %62 = vector.extract_strided_slice %60 {offsets = [0, 0], sizes = [2, 64], strides = [1, 1]} : vector<2x96xf32> to vector<2x64xf32>
    %63 = vector.extract_strided_slice %61 {offsets = [0, 0], sizes = [2, 64], strides = [1, 1]} : vector<2x96xf32> to vector<2x64xf32>
    %64 = arith.addf %62, %63 : vector<2x64xf32>
    %65 = arith.negf %64 : vector<2x64xf32>
    %66 = math.exp %65 : vector<2x64xf32>
    %cst_20 = arith.constant 1.000000e+00 : f32
    %67 = vector.broadcast %cst_20 : f32 to vector<2x64xf32>
    %68 = arith.addf %67, %66 : vector<2x64xf32>
    %69 = arith.divf %67, %68 : vector<2x64xf32>
    %70 = vector.extract_strided_slice %69 {offsets = [0, 0], sizes = [2, 32], strides = [1, 1]} : vector<2x64xf32> to vector<2x32xf32>
    %71 = vector.extract_strided_slice %69 {offsets = [0, 32], sizes = [2, 32], strides = [1, 1]} : vector<2x64xf32> to vector<2x32xf32>
    %72 = vector.extract_strided_slice %60 {offsets = [0, 64], sizes = [2, 32], strides = [1, 1]} : vector<2x96xf32> to vector<2x32xf32>
    %73 = vector.extract_strided_slice %61 {offsets = [0, 64], sizes = [2, 32], strides = [1, 1]} : vector<2x96xf32> to vector<2x32xf32>
    %74 = arith.addf %73, %8 : vector<2x32xf32>
    %75 = arith.mulf %70, %74 : vector<2x32xf32>
    %76 = arith.addf %72, %75 : vector<2x32xf32>
    %77 = math.tanh %76 : vector<2x32xf32>
    %cst_21 = arith.constant 1.000000e+00 : f32
    %78 = vector.broadcast %cst_21 : f32 to vector<2x32xf32>
    %79 = arith.subf %78, %71 : vector<2x32xf32>
    %80 = arith.mulf %79, %77 : vector<2x32xf32>
    %81 = arith.mulf %71, %58 : vector<2x32xf32>
    %82 = arith.addf %80, %81 : vector<2x32xf32>
    %c4 = arith.constant 4 : index
    %c0_22 = arith.constant 0 : index
    %83 = vector.load %arg12[%c4, %c0_22] : memref<16x32xf32, #tpu.memory_space<vmem>>, vector<2x32xf32>
    tpu.vector_store %arg12[%c4, %c0_22], %82 {strides = array<i32>} : memref<16x32xf32, #tpu.memory_space<vmem>>, vector<2x32xf32>,
    %84 = vector.extract_strided_slice %10 {offsets = [6, 0], sizes = [2, 96], strides = [1, 1]} : vector<16x96xf32> to vector<2x96xf32>
    %cst_23 = arith.constant dense<0.000000e+00> : vector<2x96xf32>
    %85 = tpu.matmul %82, %2, %cst_23 {dimension_numbers = #tpu.dot_dimension_numbers<[1], [0], [0], [1], [0, 0, 1, 1], [], []>} : vector<2x32xf32>, vector<32x96xf32>, vector<2x96xf32> -> vector<2x96xf32>
    %86 = vector.extract_strided_slice %84 {offsets = [0, 0], sizes = [2, 64], strides = [1, 1]} : vector<2x96xf32> to vector<2x64xf32>
    %87 = vector.extract_strided_slice %85 {offsets = [0, 0], sizes = [2, 64], strides = [1, 1]} : vector<2x96xf32> to vector<2x64xf32>
    %88 = arith.addf %86, %87 : vector<2x64xf32>
    %89 = arith.negf %88 : vector<2x64xf32>
    %90 = math.exp %89 : vector<2x64xf32>
    %cst_24 = arith.constant 1.000000e+00 : f32
    %91 = vector.broadcast %cst_24 : f32 to vector<2x64xf32>
    %92 = arith.addf %91, %90 : vector<2x64xf32>
    %93 = arith.divf %91, %92 : vector<2x64xf32>
    %94 = vector.extract_strided_slice %93 {offsets = [0, 0], sizes = [2, 32], strides = [1, 1]} : vector<2x64xf32> to vector<2x32xf32>
    %95 = vector.extract_strided_slice %93 {offsets = [0, 32], sizes = [2, 32], strides = [1, 1]} : vector<2x64xf32> to vector<2x32xf32>
    %96 = vector.extract_strided_slice %84 {offsets = [0, 64], sizes = [2, 32], strides = [1, 1]} : vector<2x96xf32> to vector<2x32xf32>
    %97 = vector.extract_strided_slice %85 {offsets = [0, 64], sizes = [2, 32], strides = [1, 1]} : vector<2x96xf32> to vector<2x32xf32>
    %98 = arith.addf %97, %8 : vector<2x32xf32>
    %99 = arith.mulf %94, %98 : vector<2x32xf32>
    %100 = arith.addf %96, %99 : vector<2x32xf32>
    %101 = math.tanh %100 : vector<2x32xf32>
    %cst_25 = arith.constant 1.000000e+00 : f32
    %102 = vector.broadcast %cst_25 : f32 to vector<2x32xf32>
    %103 = arith.subf %102, %95 : vector<2x32xf32>
    %104 = arith.mulf %103, %101 : vector<2x32xf32>
    %105 = arith.mulf %95, %82 : vector<2x32xf32>
    %106 = arith.addf %104, %105 : vector<2x32xf32>
    %c6 = arith.constant 6 : index
    %c0_26 = arith.constant 0 : index
    %107 = vector.load %arg12[%c6, %c0_26] : memref<16x32xf32, #tpu.memory_space<vmem>>, vector<2x32xf32>
    tpu.vector_store %arg12[%c6, %c0_26], %106 {strides = array<i32>} : memref<16x32xf32, #tpu.memory_space<vmem>>, vector<2x32xf32>,
    %108 = vector.extract_strided_slice %10 {offsets = [8, 0], sizes = [2, 96], strides = [1, 1]} : vector<16x96xf32> to vector<2x96xf32>
    %cst_27 = arith.constant dense<0.000000e+00> : vector<2x96xf32>
    %109 = tpu.matmul %106, %2, %cst_27 {dimension_numbers = #tpu.dot_dimension_numbers<[1], [0], [0], [1], [0, 0, 1, 1], [], []>} : vector<2x32xf32>, vector<32x96xf32>, vector<2x96xf32> -> vector<2x96xf32>
    %110 = vector.extract_strided_slice %108 {offsets = [0, 0], sizes = [2, 64], strides = [1, 1]} : vector<2x96xf32> to vector<2x64xf32>
    %111 = vector.extract_strided_slice %109 {offsets = [0, 0], sizes = [2, 64], strides = [1, 1]} : vector<2x96xf32> to vector<2x64xf32>
    %112 = arith.addf %110, %111 : vector<2x64xf32>
    %113 = arith.negf %112 : vector<2x64xf32>
    %114 = math.exp %113 : vector<2x64xf32>
    %cst_28 = arith.constant 1.000000e+00 : f32
    %115 = vector.broadcast %cst_28 : f32 to vector<2x64xf32>
    %116 = arith.addf %115, %114 : vector<2x64xf32>
    %117 = arith.divf %115, %116 : vector<2x64xf32>
    %118 = vector.extract_strided_slice %117 {offsets = [0, 0], sizes = [2, 32], strides = [1, 1]} : vector<2x64xf32> to vector<2x32xf32>
    %119 = vector.extract_strided_slice %117 {offsets = [0, 32], sizes = [2, 32], strides = [1, 1]} : vector<2x64xf32> to vector<2x32xf32>
    %120 = vector.extract_strided_slice %108 {offsets = [0, 64], sizes = [2, 32], strides = [1, 1]} : vector<2x96xf32> to vector<2x32xf32>
    %121 = vector.extract_strided_slice %109 {offsets = [0, 64], sizes = [2, 32], strides = [1, 1]} : vector<2x96xf32> to vector<2x32xf32>
    %122 = arith.addf %121, %8 : vector<2x32xf32>
    %123 = arith.mulf %118, %122 : vector<2x32xf32>
    %124 = arith.addf %120, %123 : vector<2x32xf32>
    %125 = math.tanh %124 : vector<2x32xf32>
    %cst_29 = arith.constant 1.000000e+00 : f32
    %126 = vector.broadcast %cst_29 : f32 to vector<2x32xf32>
    %127 = arith.subf %126, %119 : vector<2x32xf32>
    %128 = arith.mulf %127, %125 : vector<2x32xf32>
    %129 = arith.mulf %119, %106 : vector<2x32xf32>
    %130 = arith.addf %128, %129 : vector<2x32xf32>
    %c8 = arith.constant 8 : index
    %c0_30 = arith.constant 0 : index
    %131 = vector.load %arg12[%c8, %c0_30] : memref<16x32xf32, #tpu.memory_space<vmem>>, vector<2x32xf32>
    tpu.vector_store %arg12[%c8, %c0_30], %130 {strides = array<i32>} : memref<16x32xf32, #tpu.memory_space<vmem>>, vector<2x32xf32>,
    %132 = vector.extract_strided_slice %10 {offsets = [10, 0], sizes = [2, 96], strides = [1, 1]} : vector<16x96xf32> to vector<2x96xf32>
    %cst_31 = arith.constant dense<0.000000e+00> : vector<2x96xf32>
    %133 = tpu.matmul %130, %2, %cst_31 {dimension_numbers = #tpu.dot_dimension_numbers<[1], [0], [0], [1], [0, 0, 1, 1], [], []>} : vector<2x32xf32>, vector<32x96xf32>, vector<2x96xf32> -> vector<2x96xf32>
    %134 = vector.extract_strided_slice %132 {offsets = [0, 0], sizes = [2, 64], strides = [1, 1]} : vector<2x96xf32> to vector<2x64xf32>
    %135 = vector.extract_strided_slice %133 {offsets = [0, 0], sizes = [2, 64], strides = [1, 1]} : vector<2x96xf32> to vector<2x64xf32>
    %136 = arith.addf %134, %135 : vector<2x64xf32>
    %137 = arith.negf %136 : vector<2x64xf32>
    %138 = math.exp %137 : vector<2x64xf32>
    %cst_32 = arith.constant 1.000000e+00 : f32
    %139 = vector.broadcast %cst_32 : f32 to vector<2x64xf32>
    %140 = arith.addf %139, %138 : vector<2x64xf32>
    %141 = arith.divf %139, %140 : vector<2x64xf32>
    %142 = vector.extract_strided_slice %141 {offsets = [0, 0], sizes = [2, 32], strides = [1, 1]} : vector<2x64xf32> to vector<2x32xf32>
    %143 = vector.extract_strided_slice %141 {offsets = [0, 32], sizes = [2, 32], strides = [1, 1]} : vector<2x64xf32> to vector<2x32xf32>
    %144 = vector.extract_strided_slice %132 {offsets = [0, 64], sizes = [2, 32], strides = [1, 1]} : vector<2x96xf32> to vector<2x32xf32>
    %145 = vector.extract_strided_slice %133 {offsets = [0, 64], sizes = [2, 32], strides = [1, 1]} : vector<2x96xf32> to vector<2x32xf32>
    %146 = arith.addf %145, %8 : vector<2x32xf32>
    %147 = arith.mulf %142, %146 : vector<2x32xf32>
    %148 = arith.addf %144, %147 : vector<2x32xf32>
    %149 = math.tanh %148 : vector<2x32xf32>
    %cst_33 = arith.constant 1.000000e+00 : f32
    %150 = vector.broadcast %cst_33 : f32 to vector<2x32xf32>
    %151 = arith.subf %150, %143 : vector<2x32xf32>
    %152 = arith.mulf %151, %149 : vector<2x32xf32>
    %153 = arith.mulf %143, %130 : vector<2x32xf32>
    %154 = arith.addf %152, %153 : vector<2x32xf32>
    %c10 = arith.constant 10 : index
    %c0_34 = arith.constant 0 : index
    %155 = vector.load %arg12[%c10, %c0_34] : memref<16x32xf32, #tpu.memory_space<vmem>>, vector<2x32xf32>
    tpu.vector_store %arg12[%c10, %c0_34], %154 {strides = array<i32>} : memref<16x32xf32, #tpu.memory_space<vmem>>, vector<2x32xf32>,
    %156 = vector.extract_strided_slice %10 {offsets = [12, 0], sizes = [2, 96], strides = [1, 1]} : vector<16x96xf32> to vector<2x96xf32>
    %cst_35 = arith.constant dense<0.000000e+00> : vector<2x96xf32>
    %157 = tpu.matmul %154, %2, %cst_35 {dimension_numbers = #tpu.dot_dimension_numbers<[1], [0], [0], [1], [0, 0, 1, 1], [], []>} : vector<2x32xf32>, vector<32x96xf32>, vector<2x96xf32> -> vector<2x96xf32>
    %158 = vector.extract_strided_slice %156 {offsets = [0, 0], sizes = [2, 64], strides = [1, 1]} : vector<2x96xf32> to vector<2x64xf32>
    %159 = vector.extract_strided_slice %157 {offsets = [0, 0], sizes = [2, 64], strides = [1, 1]} : vector<2x96xf32> to vector<2x64xf32>
    %160 = arith.addf %158, %159 : vector<2x64xf32>
    %161 = arith.negf %160 : vector<2x64xf32>
    %162 = math.exp %161 : vector<2x64xf32>
    %cst_36 = arith.constant 1.000000e+00 : f32
    %163 = vector.broadcast %cst_36 : f32 to vector<2x64xf32>
    %164 = arith.addf %163, %162 : vector<2x64xf32>
    %165 = arith.divf %163, %164 : vector<2x64xf32>
    %166 = vector.extract_strided_slice %165 {offsets = [0, 0], sizes = [2, 32], strides = [1, 1]} : vector<2x64xf32> to vector<2x32xf32>
    %167 = vector.extract_strided_slice %165 {offsets = [0, 32], sizes = [2, 32], strides = [1, 1]} : vector<2x64xf32> to vector<2x32xf32>
    %168 = vector.extract_strided_slice %156 {offsets = [0, 64], sizes = [2, 32], strides = [1, 1]} : vector<2x96xf32> to vector<2x32xf32>
    %169 = vector.extract_strided_slice %157 {offsets = [0, 64], sizes = [2, 32], strides = [1, 1]} : vector<2x96xf32> to vector<2x32xf32>
    %170 = arith.addf %169, %8 : vector<2x32xf32>
    %171 = arith.mulf %166, %170 : vector<2x32xf32>
    %172 = arith.addf %168, %171 : vector<2x32xf32>
    %173 = math.tanh %172 : vector<2x32xf32>
    %cst_37 = arith.constant 1.000000e+00 : f32
    %174 = vector.broadcast %cst_37 : f32 to vector<2x32xf32>
    %175 = arith.subf %174, %167 : vector<2x32xf32>
    %176 = arith.mulf %175, %173 : vector<2x32xf32>
    %177 = arith.mulf %167, %154 : vector<2x32xf32>
    %178 = arith.addf %176, %177 : vector<2x32xf32>
    %c12 = arith.constant 12 : index
    %c0_38 = arith.constant 0 : index
    %179 = vector.load %arg12[%c12, %c0_38] : memref<16x32xf32, #tpu.memory_space<vmem>>, vector<2x32xf32>
    tpu.vector_store %arg12[%c12, %c0_38], %178 {strides = array<i32>} : memref<16x32xf32, #tpu.memory_space<vmem>>, vector<2x32xf32>,
    %180 = vector.extract_strided_slice %10 {offsets = [14, 0], sizes = [2, 96], strides = [1, 1]} : vector<16x96xf32> to vector<2x96xf32>
    %cst_39 = arith.constant dense<0.000000e+00> : vector<2x96xf32>
    %181 = tpu.matmul %178, %2, %cst_39 {dimension_numbers = #tpu.dot_dimension_numbers<[1], [0], [0], [1], [0, 0, 1, 1], [], []>} : vector<2x32xf32>, vector<32x96xf32>, vector<2x96xf32> -> vector<2x96xf32>
    %182 = vector.extract_strided_slice %180 {offsets = [0, 0], sizes = [2, 64], strides = [1, 1]} : vector<2x96xf32> to vector<2x64xf32>
    %183 = vector.extract_strided_slice %181 {offsets = [0, 0], sizes = [2, 64], strides = [1, 1]} : vector<2x96xf32> to vector<2x64xf32>
    %184 = arith.addf %182, %183 : vector<2x64xf32>
    %185 = arith.negf %184 : vector<2x64xf32>
    %186 = math.exp %185 : vector<2x64xf32>
    %cst_40 = arith.constant 1.000000e+00 : f32
    %187 = vector.broadcast %cst_40 : f32 to vector<2x64xf32>
    %188 = arith.addf %187, %186 : vector<2x64xf32>
    %189 = arith.divf %187, %188 : vector<2x64xf32>
    %190 = vector.extract_strided_slice %189 {offsets = [0, 0], sizes = [2, 32], strides = [1, 1]} : vector<2x64xf32> to vector<2x32xf32>
    %191 = vector.extract_strided_slice %189 {offsets = [0, 32], sizes = [2, 32], strides = [1, 1]} : vector<2x64xf32> to vector<2x32xf32>
    %192 = vector.extract_strided_slice %180 {offsets = [0, 64], sizes = [2, 32], strides = [1, 1]} : vector<2x96xf32> to vector<2x32xf32>
    %193 = vector.extract_strided_slice %181 {offsets = [0, 64], sizes = [2, 32], strides = [1, 1]} : vector<2x96xf32> to vector<2x32xf32>
    %194 = arith.addf %193, %8 : vector<2x32xf32>
    %195 = arith.mulf %190, %194 : vector<2x32xf32>
    %196 = arith.addf %192, %195 : vector<2x32xf32>
    %197 = math.tanh %196 : vector<2x32xf32>
    %cst_41 = arith.constant 1.000000e+00 : f32
    %198 = vector.broadcast %cst_41 : f32 to vector<2x32xf32>
    %199 = arith.subf %198, %191 : vector<2x32xf32>
    %200 = arith.mulf %199, %197 : vector<2x32xf32>
    %201 = arith.mulf %191, %178 : vector<2x32xf32>
    %202 = arith.addf %200, %201 : vector<2x32xf32>
    %c14 = arith.constant 14 : index
    %c0_42 = arith.constant 0 : index
    %203 = vector.load %arg12[%c14, %c0_42] : memref<16x32xf32, #tpu.memory_space<vmem>>, vector<2x32xf32>
    tpu.vector_store %arg12[%c14, %c0_42], %202 {strides = array<i32>} : memref<16x32xf32, #tpu.memory_space<vmem>>, vector<2x32xf32>,
    %c0_43 = arith.constant 0 : index
    %c0_44 = arith.constant 0 : index
    %204 = vector.load %arg12[%c0_43, %c0_44] : memref<16x32xf32, #tpu.memory_space<vmem>>, vector<16x32xf32>
    %c0_45 = arith.constant 0 : index
    %c0_46 = arith.constant 0 : index
    %205 = vector.load %arg5[%c0_45, %c0_46] : memref<32x96xf32, #tpu.memory_space<vmem>>, vector<32x96xf32>
    %c0_47 = arith.constant 0 : index
    %c0_48 = arith.constant 0 : index
    %206 = vector.load %arg7[%c0_47, %c0_48] : memref<32x96xf32, #tpu.memory_space<vmem>>, vector<32x96xf32>
    %c0_49 = arith.constant 0 : index
    %c0_50 = arith.constant 0 : index
    %207 = vector.load %arg6[%c0_49, %c0_50] : memref<1x96xf32, #tpu.memory_space<vmem>>, vector<1x96xf32>
    %208 = vector.shape_cast %207 : vector<1x96xf32> to vector<1x96xf32>
    %209 = vector.broadcast %208 : vector<1x96xf32> to vector<16x96xf32>
    %c0_51 = arith.constant 0 : index
    %c0_52 = arith.constant 0 : index
    %210 = vector.load %arg8[%c0_51, %c0_52] : memref<1x32xf32, #tpu.memory_space<vmem>>, vector<1x32xf32>
    %211 = vector.shape_cast %210 : vector<1x32xf32> to vector<1x32xf32>
    %212 = vector.broadcast %211 : vector<1x32xf32> to vector<2x32xf32>
    %cst_53 = arith.constant dense<0.000000e+00> : vector<16x96xf32>
    %213 = tpu.matmul %204, %205, %cst_53 {dimension_numbers = #tpu.dot_dimension_numbers<[1], [0], [0], [1], [0, 0, 1, 1], [], []>} : vector<16x32xf32>, vector<32x96xf32>, vector<16x96xf32> -> vector<16x96xf32>
    %214 = arith.addf %213, %209 : vector<16x96xf32>
    %cst_54 = arith.constant 0.000000e+00 : f32
    %215 = vector.broadcast %cst_54 : f32 to vector<2x32xf32>
    %216 = vector.extract_strided_slice %214 {offsets = [0, 0], sizes = [2, 96], strides = [1, 1]} : vector<16x96xf32> to vector<2x96xf32>
    %cst_55 = arith.constant dense<0.000000e+00> : vector<2x96xf32>
    %217 = tpu.matmul %215, %206, %cst_55 {dimension_numbers = #tpu.dot_dimension_numbers<[1], [0], [0], [1], [0, 0, 1, 1], [], []>} : vector<2x32xf32>, vector<32x96xf32>, vector<2x96xf32> -> vector<2x96xf32>
    %218 = vector.extract_strided_slice %216 {offsets = [0, 0], sizes = [2, 64], strides = [1, 1]} : vector<2x96xf32> to vector<2x64xf32>
    %219 = vector.extract_strided_slice %217 {offsets = [0, 0], sizes = [2, 64], strides = [1, 1]} : vector<2x96xf32> to vector<2x64xf32>
    %220 = arith.addf %218, %219 : vector<2x64xf32>
    %221 = arith.negf %220 : vector<2x64xf32>
    %222 = math.exp %221 : vector<2x64xf32>
    %cst_56 = arith.constant 1.000000e+00 : f32
    %223 = vector.broadcast %cst_56 : f32 to vector<2x64xf32>
    %224 = arith.addf %223, %222 : vector<2x64xf32>
    %225 = arith.divf %223, %224 : vector<2x64xf32>
    %226 = vector.extract_strided_slice %225 {offsets = [0, 0], sizes = [2, 32], strides = [1, 1]} : vector<2x64xf32> to vector<2x32xf32>
    %227 = vector.extract_strided_slice %225 {offsets = [0, 32], sizes = [2, 32], strides = [1, 1]} : vector<2x64xf32> to vector<2x32xf32>
    %228 = vector.extract_strided_slice %216 {offsets = [0, 64], sizes = [2, 32], strides = [1, 1]} : vector<2x96xf32> to vector<2x32xf32>
    %229 = vector.extract_strided_slice %217 {offsets = [0, 64], sizes = [2, 32], strides = [1, 1]} : vector<2x96xf32> to vector<2x32xf32>
    %230 = arith.addf %229, %212 : vector<2x32xf32>
    %231 = arith.mulf %226, %230 : vector<2x32xf32>
    %232 = arith.addf %228, %231 : vector<2x32xf32>
    %233 = math.tanh %232 : vector<2x32xf32>
    %cst_57 = arith.constant 1.000000e+00 : f32
    %234 = vector.broadcast %cst_57 : f32 to vector<2x32xf32>
    %235 = arith.subf %234, %227 : vector<2x32xf32>
    %236 = arith.mulf %235, %233 : vector<2x32xf32>
    %237 = arith.mulf %227, %215 : vector<2x32xf32>
    %238 = arith.addf %236, %237 : vector<2x32xf32>
    %c0_58 = arith.constant 0 : index
    %c0_59 = arith.constant 0 : index
    %239 = vector.load %arg12[%c0_58, %c0_59] : memref<16x32xf32, #tpu.memory_space<vmem>>, vector<2x32xf32>
    tpu.vector_store %arg12[%c0_58, %c0_59], %238 {strides = array<i32>} : memref<16x32xf32, #tpu.memory_space<vmem>>, vector<2x32xf32>,
    %240 = vector.extract_strided_slice %214 {offsets = [2, 0], sizes = [2, 96], strides = [1, 1]} : vector<16x96xf32> to vector<2x96xf32>
    %cst_60 = arith.constant dense<0.000000e+00> : vector<2x96xf32>
    %241 = tpu.matmul %238, %206, %cst_60 {dimension_numbers = #tpu.dot_dimension_numbers<[1], [0], [0], [1], [0, 0, 1, 1], [], []>} : vector<2x32xf32>, vector<32x96xf32>, vector<2x96xf32> -> vector<2x96xf32>
    %242 = vector.extract_strided_slice %240 {offsets = [0, 0], sizes = [2, 64], strides = [1, 1]} : vector<2x96xf32> to vector<2x64xf32>
    %243 = vector.extract_strided_slice %241 {offsets = [0, 0], sizes = [2, 64], strides = [1, 1]} : vector<2x96xf32> to vector<2x64xf32>
    %244 = arith.addf %242, %243 : vector<2x64xf32>
    %245 = arith.negf %244 : vector<2x64xf32>
    %246 = math.exp %245 : vector<2x64xf32>
    %cst_61 = arith.constant 1.000000e+00 : f32
    %247 = vector.broadcast %cst_61 : f32 to vector<2x64xf32>
    %248 = arith.addf %247, %246 : vector<2x64xf32>
    %249 = arith.divf %247, %248 : vector<2x64xf32>
    %250 = vector.extract_strided_slice %249 {offsets = [0, 0], sizes = [2, 32], strides = [1, 1]} : vector<2x64xf32> to vector<2x32xf32>
    %251 = vector.extract_strided_slice %249 {offsets = [0, 32], sizes = [2, 32], strides = [1, 1]} : vector<2x64xf32> to vector<2x32xf32>
    %252 = vector.extract_strided_slice %240 {offsets = [0, 64], sizes = [2, 32], strides = [1, 1]} : vector<2x96xf32> to vector<2x32xf32>
    %253 = vector.extract_strided_slice %241 {offsets = [0, 64], sizes = [2, 32], strides = [1, 1]} : vector<2x96xf32> to vector<2x32xf32>
    %254 = arith.addf %253, %212 : vector<2x32xf32>
    %255 = arith.mulf %250, %254 : vector<2x32xf32>
    %256 = arith.addf %252, %255 : vector<2x32xf32>
    %257 = math.tanh %256 : vector<2x32xf32>
    %cst_62 = arith.constant 1.000000e+00 : f32
    %258 = vector.broadcast %cst_62 : f32 to vector<2x32xf32>
    %259 = arith.subf %258, %251 : vector<2x32xf32>
    %260 = arith.mulf %259, %257 : vector<2x32xf32>
    %261 = arith.mulf %251, %238 : vector<2x32xf32>
    %262 = arith.addf %260, %261 : vector<2x32xf32>
    %c2_63 = arith.constant 2 : index
    %c0_64 = arith.constant 0 : index
    %263 = vector.load %arg12[%c2_63, %c0_64] : memref<16x32xf32, #tpu.memory_space<vmem>>, vector<2x32xf32>
    tpu.vector_store %arg12[%c2_63, %c0_64], %262 {strides = array<i32>} : memref<16x32xf32, #tpu.memory_space<vmem>>, vector<2x32xf32>,
    %264 = vector.extract_strided_slice %214 {offsets = [4, 0], sizes = [2, 96], strides = [1, 1]} : vector<16x96xf32> to vector<2x96xf32>
    %cst_65 = arith.constant dense<0.000000e+00> : vector<2x96xf32>
    %265 = tpu.matmul %262, %206, %cst_65 {dimension_numbers = #tpu.dot_dimension_numbers<[1], [0], [0], [1], [0, 0, 1, 1], [], []>} : vector<2x32xf32>, vector<32x96xf32>, vector<2x96xf32> -> vector<2x96xf32>
    %266 = vector.extract_strided_slice %264 {offsets = [0, 0], sizes = [2, 64], strides = [1, 1]} : vector<2x96xf32> to vector<2x64xf32>
    %267 = vector.extract_strided_slice %265 {offsets = [0, 0], sizes = [2, 64], strides = [1, 1]} : vector<2x96xf32> to vector<2x64xf32>
    %268 = arith.addf %266, %267 : vector<2x64xf32>
    %269 = arith.negf %268 : vector<2x64xf32>
    %270 = math.exp %269 : vector<2x64xf32>
    %cst_66 = arith.constant 1.000000e+00 : f32
    %271 = vector.broadcast %cst_66 : f32 to vector<2x64xf32>
    %272 = arith.addf %271, %270 : vector<2x64xf32>
    %273 = arith.divf %271, %272 : vector<2x64xf32>
    %274 = vector.extract_strided_slice %273 {offsets = [0, 0], sizes = [2, 32], strides = [1, 1]} : vector<2x64xf32> to vector<2x32xf32>
    %275 = vector.extract_strided_slice %273 {offsets = [0, 32], sizes = [2, 32], strides = [1, 1]} : vector<2x64xf32> to vector<2x32xf32>
    %276 = vector.extract_strided_slice %264 {offsets = [0, 64], sizes = [2, 32], strides = [1, 1]} : vector<2x96xf32> to vector<2x32xf32>
    %277 = vector.extract_strided_slice %265 {offsets = [0, 64], sizes = [2, 32], strides = [1, 1]} : vector<2x96xf32> to vector<2x32xf32>
    %278 = arith.addf %277, %212 : vector<2x32xf32>
    %279 = arith.mulf %274, %278 : vector<2x32xf32>
    %280 = arith.addf %276, %279 : vector<2x32xf32>
    %281 = math.tanh %280 : vector<2x32xf32>
    %cst_67 = arith.constant 1.000000e+00 : f32
    %282 = vector.broadcast %cst_67 : f32 to vector<2x32xf32>
    %283 = arith.subf %282, %275 : vector<2x32xf32>
    %284 = arith.mulf %283, %281 : vector<2x32xf32>
    %285 = arith.mulf %275, %262 : vector<2x32xf32>
    %286 = arith.addf %284, %285 : vector<2x32xf32>
    %c4_68 = arith.constant 4 : index
    %c0_69 = arith.constant 0 : index
    %287 = vector.load %arg12[%c4_68, %c0_69] : memref<16x32xf32, #tpu.memory_space<vmem>>, vector<2x32xf32>
    tpu.vector_store %arg12[%c4_68, %c0_69], %286 {strides = array<i32>} : memref<16x32xf32, #tpu.memory_space<vmem>>, vector<2x32xf32>,
    %288 = vector.extract_strided_slice %214 {offsets = [6, 0], sizes = [2, 96], strides = [1, 1]} : vector<16x96xf32> to vector<2x96xf32>
    %cst_70 = arith.constant dense<0.000000e+00> : vector<2x96xf32>
    %289 = tpu.matmul %286, %206, %cst_70 {dimension_numbers = #tpu.dot_dimension_numbers<[1], [0], [0], [1], [0, 0, 1, 1], [], []>} : vector<2x32xf32>, vector<32x96xf32>, vector<2x96xf32> -> vector<2x96xf32>
    %290 = vector.extract_strided_slice %288 {offsets = [0, 0], sizes = [2, 64], strides = [1, 1]} : vector<2x96xf32> to vector<2x64xf32>
    %291 = vector.extract_strided_slice %289 {offsets = [0, 0], sizes = [2, 64], strides = [1, 1]} : vector<2x96xf32> to vector<2x64xf32>
    %292 = arith.addf %290, %291 : vector<2x64xf32>
    %293 = arith.negf %292 : vector<2x64xf32>
    %294 = math.exp %293 : vector<2x64xf32>
    %cst_71 = arith.constant 1.000000e+00 : f32
    %295 = vector.broadcast %cst_71 : f32 to vector<2x64xf32>
    %296 = arith.addf %295, %294 : vector<2x64xf32>
    %297 = arith.divf %295, %296 : vector<2x64xf32>
    %298 = vector.extract_strided_slice %297 {offsets = [0, 0], sizes = [2, 32], strides = [1, 1]} : vector<2x64xf32> to vector<2x32xf32>
    %299 = vector.extract_strided_slice %297 {offsets = [0, 32], sizes = [2, 32], strides = [1, 1]} : vector<2x64xf32> to vector<2x32xf32>
    %300 = vector.extract_strided_slice %288 {offsets = [0, 64], sizes = [2, 32], strides = [1, 1]} : vector<2x96xf32> to vector<2x32xf32>
    %301 = vector.extract_strided_slice %289 {offsets = [0, 64], sizes = [2, 32], strides = [1, 1]} : vector<2x96xf32> to vector<2x32xf32>
    %302 = arith.addf %301, %212 : vector<2x32xf32>
    %303 = arith.mulf %298, %302 : vector<2x32xf32>
    %304 = arith.addf %300, %303 : vector<2x32xf32>
    %305 = math.tanh %304 : vector<2x32xf32>
    %cst_72 = arith.constant 1.000000e+00 : f32
    %306 = vector.broadcast %cst_72 : f32 to vector<2x32xf32>
    %307 = arith.subf %306, %299 : vector<2x32xf32>
    %308 = arith.mulf %307, %305 : vector<2x32xf32>
    %309 = arith.mulf %299, %286 : vector<2x32xf32>
    %310 = arith.addf %308, %309 : vector<2x32xf32>
    %c6_73 = arith.constant 6 : index
    %c0_74 = arith.constant 0 : index
    %311 = vector.load %arg12[%c6_73, %c0_74] : memref<16x32xf32, #tpu.memory_space<vmem>>, vector<2x32xf32>
    tpu.vector_store %arg12[%c6_73, %c0_74], %310 {strides = array<i32>} : memref<16x32xf32, #tpu.memory_space<vmem>>, vector<2x32xf32>,
    %312 = vector.extract_strided_slice %214 {offsets = [8, 0], sizes = [2, 96], strides = [1, 1]} : vector<16x96xf32> to vector<2x96xf32>
    %cst_75 = arith.constant dense<0.000000e+00> : vector<2x96xf32>
    %313 = tpu.matmul %310, %206, %cst_75 {dimension_numbers = #tpu.dot_dimension_numbers<[1], [0], [0], [1], [0, 0, 1, 1], [], []>} : vector<2x32xf32>, vector<32x96xf32>, vector<2x96xf32> -> vector<2x96xf32>
    %314 = vector.extract_strided_slice %312 {offsets = [0, 0], sizes = [2, 64], strides = [1, 1]} : vector<2x96xf32> to vector<2x64xf32>
    %315 = vector.extract_strided_slice %313 {offsets = [0, 0], sizes = [2, 64], strides = [1, 1]} : vector<2x96xf32> to vector<2x64xf32>
    %316 = arith.addf %314, %315 : vector<2x64xf32>
    %317 = arith.negf %316 : vector<2x64xf32>
    %318 = math.exp %317 : vector<2x64xf32>
    %cst_76 = arith.constant 1.000000e+00 : f32
    %319 = vector.broadcast %cst_76 : f32 to vector<2x64xf32>
    %320 = arith.addf %319, %318 : vector<2x64xf32>
    %321 = arith.divf %319, %320 : vector<2x64xf32>
    %322 = vector.extract_strided_slice %321 {offsets = [0, 0], sizes = [2, 32], strides = [1, 1]} : vector<2x64xf32> to vector<2x32xf32>
    %323 = vector.extract_strided_slice %321 {offsets = [0, 32], sizes = [2, 32], strides = [1, 1]} : vector<2x64xf32> to vector<2x32xf32>
    %324 = vector.extract_strided_slice %312 {offsets = [0, 64], sizes = [2, 32], strides = [1, 1]} : vector<2x96xf32> to vector<2x32xf32>
    %325 = vector.extract_strided_slice %313 {offsets = [0, 64], sizes = [2, 32], strides = [1, 1]} : vector<2x96xf32> to vector<2x32xf32>
    %326 = arith.addf %325, %212 : vector<2x32xf32>
    %327 = arith.mulf %322, %326 : vector<2x32xf32>
    %328 = arith.addf %324, %327 : vector<2x32xf32>
    %329 = math.tanh %328 : vector<2x32xf32>
    %cst_77 = arith.constant 1.000000e+00 : f32
    %330 = vector.broadcast %cst_77 : f32 to vector<2x32xf32>
    %331 = arith.subf %330, %323 : vector<2x32xf32>
    %332 = arith.mulf %331, %329 : vector<2x32xf32>
    %333 = arith.mulf %323, %310 : vector<2x32xf32>
    %334 = arith.addf %332, %333 : vector<2x32xf32>
    %c8_78 = arith.constant 8 : index
    %c0_79 = arith.constant 0 : index
    %335 = vector.load %arg12[%c8_78, %c0_79] : memref<16x32xf32, #tpu.memory_space<vmem>>, vector<2x32xf32>
    tpu.vector_store %arg12[%c8_78, %c0_79], %334 {strides = array<i32>} : memref<16x32xf32, #tpu.memory_space<vmem>>, vector<2x32xf32>,
    %336 = vector.extract_strided_slice %214 {offsets = [10, 0], sizes = [2, 96], strides = [1, 1]} : vector<16x96xf32> to vector<2x96xf32>
    %cst_80 = arith.constant dense<0.000000e+00> : vector<2x96xf32>
    %337 = tpu.matmul %334, %206, %cst_80 {dimension_numbers = #tpu.dot_dimension_numbers<[1], [0], [0], [1], [0, 0, 1, 1], [], []>} : vector<2x32xf32>, vector<32x96xf32>, vector<2x96xf32> -> vector<2x96xf32>
    %338 = vector.extract_strided_slice %336 {offsets = [0, 0], sizes = [2, 64], strides = [1, 1]} : vector<2x96xf32> to vector<2x64xf32>
    %339 = vector.extract_strided_slice %337 {offsets = [0, 0], sizes = [2, 64], strides = [1, 1]} : vector<2x96xf32> to vector<2x64xf32>
    %340 = arith.addf %338, %339 : vector<2x64xf32>
    %341 = arith.negf %340 : vector<2x64xf32>
    %342 = math.exp %341 : vector<2x64xf32>
    %cst_81 = arith.constant 1.000000e+00 : f32
    %343 = vector.broadcast %cst_81 : f32 to vector<2x64xf32>
    %344 = arith.addf %343, %342 : vector<2x64xf32>
    %345 = arith.divf %343, %344 : vector<2x64xf32>
    %346 = vector.extract_strided_slice %345 {offsets = [0, 0], sizes = [2, 32], strides = [1, 1]} : vector<2x64xf32> to vector<2x32xf32>
    %347 = vector.extract_strided_slice %345 {offsets = [0, 32], sizes = [2, 32], strides = [1, 1]} : vector<2x64xf32> to vector<2x32xf32>
    %348 = vector.extract_strided_slice %336 {offsets = [0, 64], sizes = [2, 32], strides = [1, 1]} : vector<2x96xf32> to vector<2x32xf32>
    %349 = vector.extract_strided_slice %337 {offsets = [0, 64], sizes = [2, 32], strides = [1, 1]} : vector<2x96xf32> to vector<2x32xf32>
    %350 = arith.addf %349, %212 : vector<2x32xf32>
    %351 = arith.mulf %346, %350 : vector<2x32xf32>
    %352 = arith.addf %348, %351 : vector<2x32xf32>
    %353 = math.tanh %352 : vector<2x32xf32>
    %cst_82 = arith.constant 1.000000e+00 : f32
    %354 = vector.broadcast %cst_82 : f32 to vector<2x32xf32>
    %355 = arith.subf %354, %347 : vector<2x32xf32>
    %356 = arith.mulf %355, %353 : vector<2x32xf32>
    %357 = arith.mulf %347, %334 : vector<2x32xf32>
    %358 = arith.addf %356, %357 : vector<2x32xf32>
    %c10_83 = arith.constant 10 : index
    %c0_84 = arith.constant 0 : index
    %359 = vector.load %arg12[%c10_83, %c0_84] : memref<16x32xf32, #tpu.memory_space<vmem>>, vector<2x32xf32>
    tpu.vector_store %arg12[%c10_83, %c0_84], %358 {strides = array<i32>} : memref<16x32xf32, #tpu.memory_space<vmem>>, vector<2x32xf32>,
    %360 = vector.extract_strided_slice %214 {offsets = [12, 0], sizes = [2, 96], strides = [1, 1]} : vector<16x96xf32> to vector<2x96xf32>
    %cst_85 = arith.constant dense<0.000000e+00> : vector<2x96xf32>
    %361 = tpu.matmul %358, %206, %cst_85 {dimension_numbers = #tpu.dot_dimension_numbers<[1], [0], [0], [1], [0, 0, 1, 1], [], []>} : vector<2x32xf32>, vector<32x96xf32>, vector<2x96xf32> -> vector<2x96xf32>
    %362 = vector.extract_strided_slice %360 {offsets = [0, 0], sizes = [2, 64], strides = [1, 1]} : vector<2x96xf32> to vector<2x64xf32>
    %363 = vector.extract_strided_slice %361 {offsets = [0, 0], sizes = [2, 64], strides = [1, 1]} : vector<2x96xf32> to vector<2x64xf32>
    %364 = arith.addf %362, %363 : vector<2x64xf32>
    %365 = arith.negf %364 : vector<2x64xf32>
    %366 = math.exp %365 : vector<2x64xf32>
    %cst_86 = arith.constant 1.000000e+00 : f32
    %367 = vector.broadcast %cst_86 : f32 to vector<2x64xf32>
    %368 = arith.addf %367, %366 : vector<2x64xf32>
    %369 = arith.divf %367, %368 : vector<2x64xf32>
    %370 = vector.extract_strided_slice %369 {offsets = [0, 0], sizes = [2, 32], strides = [1, 1]} : vector<2x64xf32> to vector<2x32xf32>
    %371 = vector.extract_strided_slice %369 {offsets = [0, 32], sizes = [2, 32], strides = [1, 1]} : vector<2x64xf32> to vector<2x32xf32>
    %372 = vector.extract_strided_slice %360 {offsets = [0, 64], sizes = [2, 32], strides = [1, 1]} : vector<2x96xf32> to vector<2x32xf32>
    %373 = vector.extract_strided_slice %361 {offsets = [0, 64], sizes = [2, 32], strides = [1, 1]} : vector<2x96xf32> to vector<2x32xf32>
    %374 = arith.addf %373, %212 : vector<2x32xf32>
    %375 = arith.mulf %370, %374 : vector<2x32xf32>
    %376 = arith.addf %372, %375 : vector<2x32xf32>
    %377 = math.tanh %376 : vector<2x32xf32>
    %cst_87 = arith.constant 1.000000e+00 : f32
    %378 = vector.broadcast %cst_87 : f32 to vector<2x32xf32>
    %379 = arith.subf %378, %371 : vector<2x32xf32>
    %380 = arith.mulf %379, %377 : vector<2x32xf32>
    %381 = arith.mulf %371, %358 : vector<2x32xf32>
    %382 = arith.addf %380, %381 : vector<2x32xf32>
    %c12_88 = arith.constant 12 : index
    %c0_89 = arith.constant 0 : index
    %383 = vector.load %arg12[%c12_88, %c0_89] : memref<16x32xf32, #tpu.memory_space<vmem>>, vector<2x32xf32>
    tpu.vector_store %arg12[%c12_88, %c0_89], %382 {strides = array<i32>} : memref<16x32xf32, #tpu.memory_space<vmem>>, vector<2x32xf32>,
    %384 = vector.extract_strided_slice %214 {offsets = [14, 0], sizes = [2, 96], strides = [1, 1]} : vector<16x96xf32> to vector<2x96xf32>
    %cst_90 = arith.constant dense<0.000000e+00> : vector<2x96xf32>
    %385 = tpu.matmul %382, %206, %cst_90 {dimension_numbers = #tpu.dot_dimension_numbers<[1], [0], [0], [1], [0, 0, 1, 1], [], []>} : vector<2x32xf32>, vector<32x96xf32>, vector<2x96xf32> -> vector<2x96xf32>
    %386 = vector.extract_strided_slice %384 {offsets = [0, 0], sizes = [2, 64], strides = [1, 1]} : vector<2x96xf32> to vector<2x64xf32>
    %387 = vector.extract_strided_slice %385 {offsets = [0, 0], sizes = [2, 64], strides = [1, 1]} : vector<2x96xf32> to vector<2x64xf32>
    %388 = arith.addf %386, %387 : vector<2x64xf32>
    %389 = arith.negf %388 : vector<2x64xf32>
    %390 = math.exp %389 : vector<2x64xf32>
    %cst_91 = arith.constant 1.000000e+00 : f32
    %391 = vector.broadcast %cst_91 : f32 to vector<2x64xf32>
    %392 = arith.addf %391, %390 : vector<2x64xf32>
    %393 = arith.divf %391, %392 : vector<2x64xf32>
    %394 = vector.extract_strided_slice %393 {offsets = [0, 0], sizes = [2, 32], strides = [1, 1]} : vector<2x64xf32> to vector<2x32xf32>
    %395 = vector.extract_strided_slice %393 {offsets = [0, 32], sizes = [2, 32], strides = [1, 1]} : vector<2x64xf32> to vector<2x32xf32>
    %396 = vector.extract_strided_slice %384 {offsets = [0, 64], sizes = [2, 32], strides = [1, 1]} : vector<2x96xf32> to vector<2x32xf32>
    %397 = vector.extract_strided_slice %385 {offsets = [0, 64], sizes = [2, 32], strides = [1, 1]} : vector<2x96xf32> to vector<2x32xf32>
    %398 = arith.addf %397, %212 : vector<2x32xf32>
    %399 = arith.mulf %394, %398 : vector<2x32xf32>
    %400 = arith.addf %396, %399 : vector<2x32xf32>
    %401 = math.tanh %400 : vector<2x32xf32>
    %cst_92 = arith.constant 1.000000e+00 : f32
    %402 = vector.broadcast %cst_92 : f32 to vector<2x32xf32>
    %403 = arith.subf %402, %395 : vector<2x32xf32>
    %404 = arith.mulf %403, %401 : vector<2x32xf32>
    %405 = arith.mulf %395, %382 : vector<2x32xf32>
    %406 = arith.addf %404, %405 : vector<2x32xf32>
    %c14_93 = arith.constant 14 : index
    %c0_94 = arith.constant 0 : index
    %407 = vector.load %arg12[%c14_93, %c0_94] : memref<16x32xf32, #tpu.memory_space<vmem>>, vector<2x32xf32>
    tpu.vector_store %arg12[%c14_93, %c0_94], %406 {strides = array<i32>} : memref<16x32xf32, #tpu.memory_space<vmem>>, vector<2x32xf32>,
    %c0_95 = arith.constant 0 : index
    %c0_96 = arith.constant 0 : index
    %408 = vector.load %arg12[%c0_95, %c0_96] : memref<16x32xf32, #tpu.memory_space<vmem>>, vector<16x32xf32>
    %c0_97 = arith.constant 0 : index
    %c0_98 = arith.constant 0 : index
    %409 = vector.load %arg9[%c0_97, %c0_98] : memref<32x4xf32, #tpu.memory_space<vmem>>, vector<32x4xf32>
    %c0_99 = arith.constant 0 : index
    %c0_100 = arith.constant 0 : index
    %410 = vector.load %arg10[%c0_99, %c0_100] : memref<1x4xf32, #tpu.memory_space<vmem>>, vector<1x4xf32>
    %411 = vector.shape_cast %410 : vector<1x4xf32> to vector<1x4xf32>
    %412 = vector.broadcast %411 : vector<1x4xf32> to vector<16x4xf32>
    %cst_101 = arith.constant dense<0.000000e+00> : vector<16x4xf32>
    %413 = tpu.matmul %408, %409, %cst_101 {dimension_numbers = #tpu.dot_dimension_numbers<[1], [0], [0], [1], [0, 0, 1, 1], [], []>} : vector<16x32xf32>, vector<32x4xf32>, vector<16x4xf32> -> vector<16x4xf32>
    %414 = arith.addf %413, %412 : vector<16x4xf32>
    %c0_102 = arith.constant 0 : index
    %c0_103 = arith.constant 0 : index
    %415 = vector.load %arg11[%c0_102, %c0_103] : memref<16x4xf32, #tpu.memory_space<vmem>>, vector<16x4xf32>
    tpu.vector_store %arg11[%c0_102, %c0_103], %414 {strides = array<i32>} : memref<16x4xf32, #tpu.memory_space<vmem>>, vector<16x4xf32>,
    return
  }
}

</mosaic_0001>

<llo_original>
// kernel: fwd.1
$region0: #{fwd.1}
  #allocation0 [shape = 'u32[]', space=smem, size = 0x4, offset = 0x4, fixed_abs, tag = 'smem constant byte address 0x4 - core index']
  #allocation1 [shape = 'u32[72,128]{1,0:T(1,128)}', space=vmem, size = 0x9000, scoped, tag = 'internal scratch']
  #allocation2 [shape = 'f32[16,32]{1,0:T(8,128)}', space=vmem, size = 0x2000, scoped, tag = 'scratch operand']
  %s0 = inlined_call_operand.vmem [shape: f32[16,32], index: 0, kind: input, shape index: {}]
  %s1 = inlined_call_operand.hbm [shape: f32[32,96], index: 1, kind: input, shape index: {}]
  %s2 = inlined_call_operand.vmem [shape: f32[1,96], index: 2, kind: input, shape index: {}]
  %s3 = inlined_call_operand.vmem [shape: f32[32,96], index: 3, kind: input, shape index: {}]
  %s4 = inlined_call_operand.vmem [shape: f32[1,32], index: 4, kind: input, shape index: {}]
  %s5 = inlined_call_operand.vmem [shape: f32[32,96], index: 5, kind: input, shape index: {}]
  %s6 = inlined_call_operand.vmem [shape: f32[1,96], index: 6, kind: input, shape index: {}]
  %s7 = inlined_call_operand.vmem [shape: f32[32,96], index: 7, kind: input, shape index: {}]
  %s8 = inlined_call_operand.vmem [shape: f32[1,32], index: 8, kind: input, shape index: {}]
  %s9 = inlined_call_operand.vmem [shape: f32[32,4], index: 9, kind: input, shape index: {}]
  %s10 = inlined_call_operand.vmem [shape: f32[1,4], index: 10, kind: input, shape index: {}]
  %s11 = inlined_call_operand.vmem [shape: f32[16,4], index: 11, kind: output, shape index: {}]
  %s12 = sld [smem:[#allocation0]]
  $region58: #{fwd.1} parent=0
    _
  %s14 = ssub.s32 1, %s12
  %s15 = scalar_select 0, %s14, %s12
  $region1: #{fwd.1} parent=0
    #allocation3 [shape = 'u8[16384]{0}', space=vmem, size = 0x4000, scoped, tag = 'input window, operand 1, single buffered']
    #allocation4 [shape = 's32[1]{0}', space=sflag, size = 0x4, scoped, tag = 'scoped memory for fwd.1']
    %16 = vsyncpa [#allocation4], 0
    // Predicated region
    $region2: #{fwd.1} parent=1 // pred_check
      _
    $region3: #{fwd.1} parent=1 // pred_check_branch
      %18 = sbr.rel (0) target = $region5
    $region4: #{fwd.1} parent=1 // pred_region
      _
    $region5: #{fwd.1} parent=1 // pred_fallthru
      _
    // Predicated region
    $region6: #{fwd.1} parent=1 // pred_check
      _
    $region7: #{fwd.1} parent=1 // pred_check_branch
      %20 = sbr.rel (0) target = $region9
    $region8: #{fwd.1} parent=1 // pred_region
      %22 = vsyncadd [#allocation4], 0
      %s23 = sshll.u32 %s1, 4
      %s24 = int_to_ptr.hbm [resolvable:$true] %s23
      %s25 = sshll.u32 [#allocation3], 4
      %s26 = int_to_ptr.vmem [resolvable:$true] %s25
      %31 = dma.hbm_to_vmem [thread:$0]  %s24, 512, %s26, [#allocation4], 128, 128, 8
    $region9: #{fwd.1} parent=1 // pred_fallthru
      _
    // Predicated region
    $region10: #{fwd.1} parent=1 // pred_check
      _
    $region11: #{fwd.1} parent=1 // pred_check_branch
      %33 = sbr.rel (0) target = $region13
    $region12: #{fwd.1} parent=1 // pred_region
      _
    $region13: #{fwd.1} parent=1 // pred_fallthru
      _
    // Predicated region
    $region14: #{fwd.1} parent=1 // pred_check
      _
    $region15: #{fwd.1} parent=1 // pred_check_branch
      %35 = sbr.rel (0) target = $region17
    $region16: #{fwd.1} parent=1 // pred_region
      _
    $region17: #{fwd.1} parent=1 // pred_fallthru
      _
    // Predicated region
    $region18: #{fwd.1} parent=1 // pred_check
      _
    $region19: #{fwd.1} parent=1 // pred_check_branch
      %37 = sbr.rel (0) target = $region21
    $region20: #{fwd.1} parent=1 // pred_region
      _
    $region21: #{fwd.1} parent=1 // pred_fallthru
      _
    // Predicated region
    $region22: #{fwd.1} parent=1 // pred_check
      _
    $region23: #{fwd.1} parent=1 // pred_check_branch
      %39 = sbr.rel (0) target = $region25
    $region24: #{fwd.1} parent=1 // pred_region
      _
    $region25: #{fwd.1} parent=1 // pred_fallthru
      _
    // Predicated region
    $region26: #{fwd.1} parent=1 // pred_check
      _
    $region27: #{fwd.1} parent=1 // pred_check_branch
      %41 = sbr.rel (0) target = $region29
    $region28: #{fwd.1} parent=1 // pred_region
      _
    $region29: #{fwd.1} parent=1 // pred_fallthru
      _
    // Predicated region
    $region30: #{fwd.1} parent=1 // pred_check
      _
    $region31: #{fwd.1} parent=1 // pred_check_branch
      %43 = sbr.rel (0) target = $region33
    $region32: #{fwd.1} parent=1 // pred_region
      _
    $region33: #{fwd.1} parent=1 // pred_fallthru
      _
    // Predicated region
    $region34: #{fwd.1} parent=1 // pred_check
      _
    $region35: #{fwd.1} parent=1 // pred_check_branch
      %45 = sbr.rel (0) target = $region37
    $region36: #{fwd.1} parent=1 // pred_region
      _
    $region37: #{fwd.1} parent=1 // pred_fallthru
      _
    // Predicated region
    $region38: #{fwd.1} parent=1 // pred_check
      _
    $region39: #{fwd.1} parent=1 // pred_check_branch
      %47 = sbr.rel (0) target = $region41
    $region40: #{fwd.1} parent=1 // pred_region
      _
    $region41: #{fwd.1} parent=1 // pred_fallthru
      _
    // Predicated region
    $region42: #{fwd.1} parent=1 // pred_check
      _
    $region43: #{fwd.1} parent=1 // pred_check_branch
      %49 = sbr.rel (0) target = $region45
    $region44: #{fwd.1} parent=1 // pred_region
      _
    $region45: #{fwd.1} parent=1 // pred_fallthru
      _
    // Predicated region
    $region46: #{fwd.1} parent=1 // pred_check
      _
    $region47: #{fwd.1} parent=1 // pred_check_branch
      %51 = sbr.rel (0) target = $region49
    $region48: #{fwd.1} parent=1 // pred_region
      %53 = dma.done [#allocation4], 512
    $region49: #{fwd.1} parent=1 // pred_fallthru
      _
    %v54 = vld [vmem:[%s0] sm:$0xff]
    %v55 = vld [vmem:[%s0 + $0x8] sm:$0xff]
    %v56 = vld [vmem:[#allocation3] sm:$0xff]
    %v57 = vld [vmem:[#allocation3 + $0x8] sm:$0xff]
    %v58 = vld [vmem:[#allocation3 + $0x10] sm:$0xff]
    %v59 = vld [vmem:[#allocation3 + $0x18] sm:$0xff]
    %v60 = vld [vmem:[%s3] sm:$0xff]
    %v61 = vld [vmem:[%s3 + $0x8] sm:$0xff]
    %v62 = vld [vmem:[%s3 + $0x10] sm:$0xff]
    %v63 = vld [vmem:[%s3 + $0x18] sm:$0xff]
    %v64 = vld [vmem:[%s2] sm:$0x1]
    %v66 = vperm.slane %v64, 0
    %v68 = vld [vmem:[%s4] sm:$0x1]
    %v70 = vperm.slane %v68, 0
    %vm71 = vcmask 261120
    %v73 = vsel %vm71, %v54, 0
    %v76 = vsel %vm71, %v55, 0
    %78 = vmatpush.msra.mxu0 0.0
    %79 = vmatpush.msra.mxu0 0.0
    %80 = vmatpush.msra.mxu0 0.0
    %81 = vmatpush.msra.mxu0 0.0
    %82 = vmatpush.msra.mxu0 0.0
    %83 = vmatpush.msra.mxu0 0.0
    %84 = vmatpush.msra.mxu0 0.0
    %85 = vmatpush.msra.mxu0 0.0
    %86 = vmatpush.msra.mxu0 0.0
    %87 = vmatpush.msra.mxu0 0.0
    %88 = vmatpush.msra.mxu0 0.0
    %89 = vmatpush.msra.mxu0 0.0
    %90 = vmatpush.msra.mxu0 %v59
    %91 = vmatpush.msra.mxu0 %v58
    %92 = vmatpush.msra.mxu0 %v57
    %93 = vmatpush.msra.mxu0 %v56
    %94 = vmatmul.f32.gmra.mxu0 %v73
    %v95 = vpop.f32.mrf.mxu0
    %v96 = vadd.f32 %v66, %v95
    %97 = vmatmul.f32.gmra.mxu0 %v76
    %v98 = vpop.f32.mrf.mxu0
    %v99 = vadd.f32 %v66, %v98
    %100 = vdwg.mxu0
    %v102 = vsel %vm71, 0.0, 0
    %104 = vmatpush.msra.mxu0 0.0
    %105 = vmatpush.msra.mxu0 0.0
    %106 = vmatpush.msra.mxu0 0.0
    %107 = vmatpush.msra.mxu0 0.0
    %108 = vmatpush.msra.mxu0 0.0
    %109 = vmatpush.msra.mxu0 0.0
    %110 = vmatpush.msra.mxu0 0.0
    %111 = vmatpush.msra.mxu0 0.0
    %112 = vmatpush.msra.mxu0 0.0
    %113 = vmatpush.msra.mxu0 0.0
    %114 = vmatpush.msra.mxu0 0.0
    %115 = vmatpush.msra.mxu0 0.0
    %116 = vmatpush.msra.mxu0 %v63
    %117 = vmatpush.msra.mxu0 %v62
    %118 = vmatpush.msra.mxu0 %v61
    %119 = vmatpush.msra.mxu0 %v60
    %120 = vmatmul.f32.gmra.mxu0 %v102
    %v121 = vpop.f32.mrf.mxu0
    %v122 = vadd.f32 0.0, %v121
    %123 = vdwg.mxu0
    %v124 = vadd.f32 %v96, %v122
    %v125 = vxor.u32 %v124, 2147483648
    %v126 = vmul.f32 %v125, 1.442695
    %v127 = vpow.pop %v126
    %v128 = vadd.f32 %v127, 1.0
    %v129 = vrcp.pop %v128
    %v130 = vmul.f32 %v128, %v129
    %v131 = vsub.f32 1.0, %v130
    %v132 = vmul.f32 %v129, %v131
    %v133 = vadd.f32 %v129, %v132
    %vm134 = vweird.f32 %v128
    %vm135 = vweird.f32 %v129
    %vm136 = vmor %vm134, %vm135
    %v137 = vsel %vm136, %v129, %v133
    %v138 = vand.u32 2147483647, %v128
    %vm139 = vcmp.eq.f32.partialorder %v138, 8.507059e+37
    %v140 = vand.u32 %v128, 2147483648
    %v141 = vor.u32 1.1754944e-38, %v140
    %v142 = vsel %vm139, %v141, %v137
    %v143 = vmul.f32 1.0, %v142
    %144 = vrot.lane.b32.xlu0 %v70, 64
    %v145 = vpop.permute.xlu0 %144
    %v147 = vadd.f32 %v122, %v145
    %149 = vrot.lane.b32.xlu0 %v147, 64
    %v150 = vpop.permute.xlu0 %149
    %v152 = vmul.f32 %v143, %v150
    %154 = vrot.lane.b32.xlu0 %v152, 64
    %v155 = vpop.permute.xlu0 %154
    %v157 = vadd.f32 %v96, %v155
    %v158 = vtanh.pop %v157
    %v159 = vsub.f32 1.0, %v143
    %161 = vrot.lane.b32.xlu0 %v158, 96
    %v162 = vpop.permute.xlu0 %161
    %v164 = vmul.f32 %v159, %v162
    %v165 = vmul.f32 %v143, 0.0
    %v166 = vadd.f32 %v164, %v165
    %168 = vrot.lane.b32.xlu0 %v166, 96
    %v169 = vpop.permute.xlu0 %168
    %vm171 = vcmask 254976
    %172 = vst.msk [vmem:[#allocation2] sm:$0x3] %vm171, %v169
    %v173 = vsel %vm71, %v169, 0
    %175 = vmatpush.msra.mxu0 0.0
    %176 = vmatpush.msra.mxu0 0.0
    %177 = vmatpush.msra.mxu0 0.0
    %178 = vmatpush.msra.mxu0 0.0
    %179 = vmatpush.msra.mxu0 0.0
    %180 = vmatpush.msra.mxu0 0.0
    %181 = vmatpush.msra.mxu0 0.0
    %182 = vmatpush.msra.mxu0 0.0
    %183 = vmatpush.msra.mxu0 0.0
    %184 = vmatpush.msra.mxu0 0.0
    %185 = vmatpush.msra.mxu0 0.0
    %186 = vmatpush.msra.mxu0 0.0
    %187 = vmatpush.msra.mxu0 %v63
    %188 = vmatpush.msra.mxu0 %v62
    %189 = vmatpush.msra.mxu0 %v61
    %190 = vmatpush.msra.mxu0 %v60
    %191 = vmatmul.f32.gmra.mxu0 %v173
    %v192 = vpop.f32.mrf.mxu0
    %v193 = vadd.f32 0.0, %v192
    %194 = vdwg.mxu0
    %v196 = vrot.slane %v193, 6
    %v198 = vadd.f32 %v96, %v196
    %v199 = vxor.u32 %v198, 2147483648
    %v200 = vmul.f32 %v199, 1.442695
    %v201 = vpow.pop %v200
    %v202 = vadd.f32 %v201, 1.0
    %v203 = vrcp.pop %v202
    %v204 = vmul.f32 %v202, %v203
    %v205 = vsub.f32 1.0, %v204
    %v206 = vmul.f32 %v203, %v205
    %v207 = vadd.f32 %v203, %v206
    %vm208 = vweird.f32 %v202
    %vm209 = vweird.f32 %v203
    %vm210 = vmor %vm208, %vm209
    %v211 = vsel %vm210, %v203, %v207
    %v212 = vand.u32 2147483647, %v202
    %vm213 = vcmp.eq.f32.partialorder %v212, 8.507059e+37
    %v214 = vand.u32 %v202, 2147483648
    %v215 = vor.u32 1.1754944e-38, %v214
    %v216 = vsel %vm213, %v215, %v211
    %v217 = vmul.f32 1.0, %v216
    %v218 = vadd.f32 %v193, %v145
    %v220 = vrot.slane %v218, 6
    %221 = vrot.lane.b32.xlu0 %v220, 64
    %v222 = vpop.permute.xlu0 %221
    %v224 = vmul.f32 %v217, %v222
    %226 = vrot.lane.b32.xlu0 %v224, 64
    %v227 = vpop.permute.xlu0 %226
    %v229 = vadd.f32 %v96, %v227
    %v230 = vtanh.pop %v229
    %v231 = vsub.f32 1.0, %v217
    %233 = vrot.lane.b32.xlu0 %v230, 96
    %v234 = vpop.permute.xlu0 %233
    %v236 = vmul.f32 %v231, %v234
    %v237 = vrot.slane %v166, 6
    %v239 = vmul.f32 %v217, %v237
    %v240 = vadd.f32 %v236, %v239
    %242 = vrot.lane.b32.xlu0 %v240, 96
    %v243 = vpop.permute.xlu0 %242
    %vm245 = vcmask 257026
    %246 = vst.msk [vmem:[#allocation2] sm:$0xc] %vm245, %v243
    %v247 = vrot.slane %v240, 2
    %248 = vrot.lane.b32.xlu0 %v247, 96
    %v249 = vpop.permute.xlu0 %248
    %v250 = vsel %vm71, %v249, 0
    %252 = vmatpush.msra.mxu0 0.0
    %253 = vmatpush.msra.mxu0 0.0
    %254 = vmatpush.msra.mxu0 0.0
    %255 = vmatpush.msra.mxu0 0.0
    %256 = vmatpush.msra.mxu0 0.0
    %257 = vmatpush.msra.mxu0 0.0
    %258 = vmatpush.msra.mxu0 0.0
    %259 = vmatpush.msra.mxu0 0.0
    %260 = vmatpush.msra.mxu0 0.0
    %261 = vmatpush.msra.mxu0 0.0
    %262 = vmatpush.msra.mxu0 0.0
    %263 = vmatpush.msra.mxu0 0.0
    %264 = vmatpush.msra.mxu0 %v63
    %265 = vmatpush.msra.mxu0 %v62
    %266 = vmatpush.msra.mxu0 %v61
    %267 = vmatpush.msra.mxu0 %v60
    %268 = vmatmul.f32.gmra.mxu0 %v250
    %v269 = vpop.f32.mrf.mxu0
    %v270 = vadd.f32 0.0, %v269
    %271 = vdwg.mxu0
    %v273 = vrot.slane %v270, 4
    %v275 = vadd.f32 %v96, %v273
    %v276 = vxor.u32 %v275, 2147483648
    %v277 = vmul.f32 %v276, 1.442695
    %v278 = vpow.pop %v277
    %v279 = vadd.f32 %v278, 1.0
    %v280 = vrcp.pop %v279
    %v281 = vmul.f32 %v279, %v280
    %v282 = vsub.f32 1.0, %v281
    %v283 = vmul.f32 %v280, %v282
    %v284 = vadd.f32 %v280, %v283
    %vm285 = vweird.f32 %v279
    %vm286 = vweird.f32 %v280
    %vm287 = vmor %vm285, %vm286
    %v288 = vsel %vm287, %v280, %v284
    %v289 = vand.u32 2147483647, %v279
    %vm290 = vcmp.eq.f32.partialorder %v289, 8.507059e+37
    %v291 = vand.u32 %v279, 2147483648
    %v292 = vor.u32 1.1754944e-38, %v291
    %v293 = vsel %vm290, %v292, %v288
    %v294 = vmul.f32 1.0, %v293
    %v295 = vadd.f32 %v270, %v145
    %v297 = vrot.slane %v295, 4
    %298 = vrot.lane.b32.xlu0 %v297, 64
    %v299 = vpop.permute.xlu0 %298
    %v301 = vmul.f32 %v294, %v299
    %303 = vrot.lane.b32.xlu0 %v301, 64
    %v304 = vpop.permute.xlu0 %303
    %v306 = vadd.f32 %v96, %v304
    %v307 = vtanh.pop %v306
    %v308 = vsub.f32 1.0, %v294
    %310 = vrot.lane.b32.xlu0 %v307, 96
    %v311 = vpop.permute.xlu0 %310
    %v313 = vmul.f32 %v308, %v311
    %v314 = vrot.slane %v240, 6
    %v316 = vmul.f32 %v294, %v314
    %v317 = vadd.f32 %v313, %v316
    %319 = vrot.lane.b32.xlu0 %v317, 96
    %v320 = vpop.permute.xlu0 %319
    %vm322 = vcmask 259076
    %323 = vst.msk [vmem:[#allocation2] sm:$0x30] %vm322, %v320
    %v324 = vrot.slane %v317, 4
    %325 = vrot.lane.b32.xlu0 %v324, 96
    %v326 = vpop.permute.xlu0 %325
    %v327 = vsel %vm71, %v326, 0
    %329 = vmatpush.msra.mxu0 0.0
    %330 = vmatpush.msra.mxu0 0.0
    %331 = vmatpush.msra.mxu0 0.0
    %332 = vmatpush.msra.mxu0 0.0
    %333 = vmatpush.msra.mxu0 0.0
    %334 = vmatpush.msra.mxu0 0.0
    %335 = vmatpush.msra.mxu0 0.0
    %336 = vmatpush.msra.mxu0 0.0
    %337 = vmatpush.msra.mxu0 0.0
    %338 = vmatpush.msra.mxu0 0.0
    %339 = vmatpush.msra.mxu0 0.0
    %340 = vmatpush.msra.mxu0 0.0
    %341 = vmatpush.msra.mxu0 %v63
    %342 = vmatpush.msra.mxu0 %v62
    %343 = vmatpush.msra.mxu0 %v61
    %344 = vmatpush.msra.mxu0 %v60
    %345 = vmatmul.f32.gmra.mxu0 %v327
    %v346 = vpop.f32.mrf.mxu0
    %v347 = vadd.f32 0.0, %v346
    %348 = vdwg.mxu0
    %v350 = vrot.slane %v347, 2
    %v352 = vadd.f32 %v96, %v350
    %v353 = vxor.u32 %v352, 2147483648
    %v354 = vmul.f32 %v353, 1.442695
    %v355 = vpow.pop %v354
    %v356 = vadd.f32 %v355, 1.0
    %v357 = vrcp.pop %v356
    %v358 = vmul.f32 %v356, %v357
    %v359 = vsub.f32 1.0, %v358
    %v360 = vmul.f32 %v357, %v359
    %v361 = vadd.f32 %v357, %v360
    %vm362 = vweird.f32 %v356
    %vm363 = vweird.f32 %v357
    %vm364 = vmor %vm362, %vm363
    %v365 = vsel %vm364, %v357, %v361
    %v366 = vand.u32 2147483647, %v356
    %vm367 = vcmp.eq.f32.partialorder %v366, 8.507059e+37
    %v368 = vand.u32 %v356, 2147483648
    %v369 = vor.u32 1.1754944e-38, %v368
    %v370 = vsel %vm367, %v369, %v365
    %v371 = vmul.f32 1.0, %v370
    %v372 = vadd.f32 %v347, %v145
    %v374 = vrot.slane %v372, 2
    %375 = vrot.lane.b32.xlu0 %v374, 64
    %v376 = vpop.permute.xlu0 %375
    %v378 = vmul.f32 %v371, %v376
    %380 = vrot.lane.b32.xlu0 %v378, 64
    %v381 = vpop.permute.xlu0 %380
    %v383 = vadd.f32 %v96, %v381
    %v384 = vtanh.pop %v383
    %v385 = vsub.f32 1.0, %v371
    %387 = vrot.lane.b32.xlu0 %v384, 96
    %v388 = vpop.permute.xlu0 %387
    %v390 = vmul.f32 %v385, %v388
    %v391 = vrot.slane %v317, 6
    %v393 = vmul.f32 %v371, %v391
    %v394 = vadd.f32 %v390, %v393
    %396 = vrot.lane.b32.xlu0 %v394, 96
    %v397 = vpop.permute.xlu0 %396
    %vm399 = vcmask 261126
    %400 = vst.msk [vmem:[#allocation2] sm:$0xc0] %vm399, %v397
    %v401 = vrot.slane %v394, 6
    %402 = vrot.lane.b32.xlu0 %v401, 96
    %v403 = vpop.permute.xlu0 %402
    %v404 = vsel %vm71, %v403, 0
    %406 = vmatpush.msra.mxu0 0.0
    %407 = vmatpush.msra.mxu0 0.0
    %408 = vmatpush.msra.mxu0 0.0
    %409 = vmatpush.msra.mxu0 0.0
    %410 = vmatpush.msra.mxu0 0.0
    %411 = vmatpush.msra.mxu0 0.0
    %412 = vmatpush.msra.mxu0 0.0
    %413 = vmatpush.msra.mxu0 0.0
    %414 = vmatpush.msra.mxu0 0.0
    %415 = vmatpush.msra.mxu0 0.0
    %416 = vmatpush.msra.mxu0 0.0
    %417 = vmatpush.msra.mxu0 0.0
    %418 = vmatpush.msra.mxu0 %v63
    %419 = vmatpush.msra.mxu0 %v62
    %420 = vmatpush.msra.mxu0 %v61
    %421 = vmatpush.msra.mxu0 %v60
    %422 = vmatmul.f32.gmra.mxu0 %v404
    %v423 = vpop.f32.mrf.mxu0
    %v424 = vadd.f32 0.0, %v423
    %425 = vdwg.mxu0
    %v426 = vadd.f32 %v99, %v424
    %v427 = vxor.u32 %v426, 2147483648
    %v428 = vmul.f32 %v427, 1.442695
    %v429 = vpow.pop %v428
    %v430 = vadd.f32 %v429, 1.0
    %v431 = vrcp.pop %v430
    %v432 = vmul.f32 %v430, %v431
    %v433 = vsub.f32 1.0, %v432
    %v434 = vmul.f32 %v431, %v433
    %v435 = vadd.f32 %v431, %v434
    %vm436 = vweird.f32 %v430
    %vm437 = vweird.f32 %v431
    %vm438 = vmor %vm436, %vm437
    %v439 = vsel %vm438, %v431, %v435
    %v440 = vand.u32 2147483647, %v430
    %vm441 = vcmp.eq.f32.partialorder %v440, 8.507059e+37
    %v442 = vand.u32 %v430, 2147483648
    %v443 = vor.u32 1.1754944e-38, %v442
    %v444 = vsel %vm441, %v443, %v439
    %v445 = vmul.f32 1.0, %v444
    %v446 = vadd.f32 %v424, %v145
    %448 = vrot.lane.b32.xlu0 %v446, 64
    %v449 = vpop.permute.xlu0 %448
    %v451 = vmul.f32 %v445, %v449
    %453 = vrot.lane.b32.xlu0 %v451, 64
    %v454 = vpop.permute.xlu0 %453
    %v456 = vadd.f32 %v99, %v454
    %v457 = vtanh.pop %v456
    %v458 = vsub.f32 1.0, %v445
    %460 = vrot.lane.b32.xlu0 %v457, 96
    %v461 = vpop.permute.xlu0 %460
    %v463 = vmul.f32 %v458, %v461
    %v465 = vmul.f32 %v445, %v401
    %v466 = vadd.f32 %v463, %v465
    %468 = vrot.lane.b32.xlu0 %v466, 96
    %v469 = vpop.permute.xlu0 %468
    %471 = vst.msk [vmem:[#allocation2 + $0x8] sm:$0x3] %vm171, %v469
    %v472 = vsel %vm71, %v469, 0
    %474 = vmatpush.msra.mxu0 0.0
    %475 = vmatpush.msra.mxu0 0.0
    %476 = vmatpush.msra.mxu0 0.0
    %477 = vmatpush.msra.mxu0 0.0
    %478 = vmatpush.msra.mxu0 0.0
    %479 = vmatpush.msra.mxu0 0.0
    %480 = vmatpush.msra.mxu0 0.0
    %481 = vmatpush.msra.mxu0 0.0
    %482 = vmatpush.msra.mxu0 0.0
    %483 = vmatpush.msra.mxu0 0.0
    %484 = vmatpush.msra.mxu0 0.0
    %485 = vmatpush.msra.mxu0 0.0
    %486 = vmatpush.msra.mxu0 %v63
    %487 = vmatpush.msra.mxu0 %v62
    %488 = vmatpush.msra.mxu0 %v61
    %489 = vmatpush.msra.mxu0 %v60
    %490 = vmatmul.f32.gmra.mxu0 %v472
    %v491 = vpop.f32.mrf.mxu0
    %v492 = vadd.f32 0.0, %v491
    %493 = vdwg.mxu0
    %v495 = vrot.slane %v492, 6
    %v497 = vadd.f32 %v99, %v495
    %v498 = vxor.u32 %v497, 2147483648
    %v499 = vmul.f32 %v498, 1.442695
    %v500 = vpow.pop %v499
    %v501 = vadd.f32 %v500, 1.0
    %v502 = vrcp.pop %v501
    %v503 = vmul.f32 %v501, %v502
    %v504 = vsub.f32 1.0, %v503
    %v505 = vmul.f32 %v502, %v504
    %v506 = vadd.f32 %v502, %v505
    %vm507 = vweird.f32 %v501
    %vm508 = vweird.f32 %v502
    %vm509 = vmor %vm507, %vm508
    %v510 = vsel %vm509, %v502, %v506
    %v511 = vand.u32 2147483647, %v501
    %vm512 = vcmp.eq.f32.partialorder %v511, 8.507059e+37
    %v513 = vand.u32 %v501, 2147483648
    %v514 = vor.u32 1.1754944e-38, %v513
    %v515 = vsel %vm512, %v514, %v510
    %v516 = vmul.f32 1.0, %v515
    %v517 = vadd.f32 %v492, %v145
    %v519 = vrot.slane %v517, 6
    %520 = vrot.lane.b32.xlu0 %v519, 64
    %v521 = vpop.permute.xlu0 %520
    %v523 = vmul.f32 %v516, %v521
    %525 = vrot.lane.b32.xlu0 %v523, 64
    %v526 = vpop.permute.xlu0 %525
    %v528 = vadd.f32 %v99, %v526
    %v529 = vtanh.pop %v528
    %v530 = vsub.f32 1.0, %v516
    %532 = vrot.lane.b32.xlu0 %v529, 96
    %v533 = vpop.permute.xlu0 %532
    %v535 = vmul.f32 %v530, %v533
    %v536 = vrot.slane %v466, 6
    %v538 = vmul.f32 %v516, %v536
    %v539 = vadd.f32 %v535, %v538
    %541 = vrot.lane.b32.xlu0 %v539, 96
    %v542 = vpop.permute.xlu0 %541
    %544 = vst.msk [vmem:[#allocation2 + $0x8] sm:$0xc] %vm245, %v542
    %v545 = vrot.slane %v539, 2
    %546 = vrot.lane.b32.xlu0 %v545, 96
    %v547 = vpop.permute.xlu0 %546
    %v548 = vsel %vm71, %v547, 0
    %550 = vmatpush.msra.mxu0 0.0
    %551 = vmatpush.msra.mxu0 0.0
    %552 = vmatpush.msra.mxu0 0.0
    %553 = vmatpush.msra.mxu0 0.0
    %554 = vmatpush.msra.mxu0 0.0
    %555 = vmatpush.msra.mxu0 0.0
    %556 = vmatpush.msra.mxu0 0.0
    %557 = vmatpush.msra.mxu0 0.0
    %558 = vmatpush.msra.mxu0 0.0
    %559 = vmatpush.msra.mxu0 0.0
    %560 = vmatpush.msra.mxu0 0.0
    %561 = vmatpush.msra.mxu0 0.0
    %562 = vmatpush.msra.mxu0 %v63
    %563 = vmatpush.msra.mxu0 %v62
    %564 = vmatpush.msra.mxu0 %v61
    %565 = vmatpush.msra.mxu0 %v60
    %566 = vmatmul.f32.gmra.mxu0 %v548
    %v567 = vpop.f32.mrf.mxu0
    %v568 = vadd.f32 0.0, %v567
    %569 = vdwg.mxu0
    %v571 = vrot.slane %v568, 4
    %v573 = vadd.f32 %v99, %v571
    %v574 = vxor.u32 %v573, 2147483648
    %v575 = vmul.f32 %v574, 1.442695
    %v576 = vpow.pop %v575
    %v577 = vadd.f32 %v576, 1.0
    %v578 = vrcp.pop %v577
    %v579 = vmul.f32 %v577, %v578
    %v580 = vsub.f32 1.0, %v579
    %v581 = vmul.f32 %v578, %v580
    %v582 = vadd.f32 %v578, %v581
    %vm583 = vweird.f32 %v577
    %vm584 = vweird.f32 %v578
    %vm585 = vmor %vm583, %vm584
    %v586 = vsel %vm585, %v578, %v582
    %v587 = vand.u32 2147483647, %v577
    %vm588 = vcmp.eq.f32.partialorder %v587, 8.507059e+37
    %v589 = vand.u32 %v577, 2147483648
    %v590 = vor.u32 1.1754944e-38, %v589
    %v591 = vsel %vm588, %v590, %v586
    %v592 = vmul.f32 1.0, %v591
    %v593 = vadd.f32 %v568, %v145
    %v595 = vrot.slane %v593, 4
    %596 = vrot.lane.b32.xlu0 %v595, 64
    %v597 = vpop.permute.xlu0 %596
    %v599 = vmul.f32 %v592, %v597
    %601 = vrot.lane.b32.xlu0 %v599, 64
    %v602 = vpop.permute.xlu0 %601
    %v604 = vadd.f32 %v99, %v602
    %v605 = vtanh.pop %v604
    %v606 = vsub.f32 1.0, %v592
    %608 = vrot.lane.b32.xlu0 %v605, 96
    %v609 = vpop.permute.xlu0 %608
    %v611 = vmul.f32 %v606, %v609
    %v612 = vrot.slane %v539, 6
    %v614 = vmul.f32 %v592, %v612
    %v615 = vadd.f32 %v611, %v614
    %617 = vrot.lane.b32.xlu0 %v615, 96
    %v618 = vpop.permute.xlu0 %617
    %620 = vst.msk [vmem:[#allocation2 + $0x8] sm:$0x30] %vm322, %v618
    %v621 = vrot.slane %v615, 4
    %622 = vrot.lane.b32.xlu0 %v621, 96
    %v623 = vpop.permute.xlu0 %622
    %v624 = vsel %vm71, %v623, 0
    %626 = vmatpush.msra.mxu0 0.0
    %627 = vmatpush.msra.mxu0 0.0
    %628 = vmatpush.msra.mxu0 0.0
    %629 = vmatpush.msra.mxu0 0.0
    %630 = vmatpush.msra.mxu0 0.0
    %631 = vmatpush.msra.mxu0 0.0
    %632 = vmatpush.msra.mxu0 0.0
    %633 = vmatpush.msra.mxu0 0.0
    %634 = vmatpush.msra.mxu0 0.0
    %635 = vmatpush.msra.mxu0 0.0
    %636 = vmatpush.msra.mxu0 0.0
    %637 = vmatpush.msra.mxu0 0.0
    %638 = vmatpush.msra.mxu0 %v63
    %639 = vmatpush.msra.mxu0 %v62
    %640 = vmatpush.msra.mxu0 %v61
    %641 = vmatpush.msra.mxu0 %v60
    %642 = vmatmul.f32.gmra.mxu0 %v624
    %v643 = vpop.f32.mrf.mxu0
    %v644 = vadd.f32 0.0, %v643
    %645 = vdwg.mxu0
    %v647 = vrot.slane %v644, 2
    %v649 = vadd.f32 %v99, %v647
    %v650 = vxor.u32 %v649, 2147483648
    %v651 = vmul.f32 %v650, 1.442695
    %v652 = vpow.pop %v651
    %v653 = vadd.f32 %v652, 1.0
    %v654 = vrcp.pop %v653
    %v655 = vmul.f32 %v653, %v654
    %v656 = vsub.f32 1.0, %v655
    %v657 = vmul.f32 %v654, %v656
    %v658 = vadd.f32 %v654, %v657
    %vm659 = vweird.f32 %v653
    %vm660 = vweird.f32 %v654
    %vm661 = vmor %vm659, %vm660
    %v662 = vsel %vm661, %v654, %v658
    %v663 = vand.u32 2147483647, %v653
    %vm664 = vcmp.eq.f32.partialorder %v663, 8.507059e+37
    %v665 = vand.u32 %v653, 2147483648
    %v666 = vor.u32 1.1754944e-38, %v665
    %v667 = vsel %vm664, %v666, %v662
    %v668 = vmul.f32 1.0, %v667
    %v669 = vadd.f32 %v644, %v145
    %v671 = vrot.slane %v669, 2
    %672 = vrot.lane.b32.xlu0 %v671, 64
    %v673 = vpop.permute.xlu0 %672
    %v675 = vmul.f32 %v668, %v673
    %677 = vrot.lane.b32.xlu0 %v675, 64
    %v678 = vpop.permute.xlu0 %677
    %v680 = vadd.f32 %v99, %v678
    %v681 = vtanh.pop %v680
    %v682 = vsub.f32 1.0, %v668
    %684 = vrot.lane.b32.xlu0 %v681, 96
    %v685 = vpop.permute.xlu0 %684
    %v687 = vmul.f32 %v682, %v685
    %v688 = vrot.slane %v615, 6
    %v690 = vmul.f32 %v668, %v688
    %v691 = vadd.f32 %v687, %v690
    %693 = vrot.lane.b32.xlu0 %v691, 96
    %v694 = vpop.permute.xlu0 %693
    %696 = vst.msk [vmem:[#allocation2 + $0x8] sm:$0xc0] %vm399, %v694
    %v697 = vld [vmem:[#allocation2] sm:$0xff]
    %v698 = vld [vmem:[#allocation2 + $0x8] sm:$0xff]
    %v699 = vld [vmem:[%s5] sm:$0xff]
    %v700 = vld [vmem:[%s5 + $0x8] sm:$0xff]
    %v701 = vld [vmem:[%s5 + $0x10] sm:$0xff]
    %v702 = vld [vmem:[%s5 + $0x18] sm:$0xff]
    %v703 = vld [vmem:[%s7] sm:$0xff]
    %v704 = vld [vmem:[%s7 + $0x8] sm:$0xff]
    %v705 = vld [vmem:[%s7 + $0x10] sm:$0xff]
    %v706 = vld [vmem:[%s7 + $0x18] sm:$0xff]
    %v707 = vld [vmem:[%s6] sm:$0x1]
    %v709 = vperm.slane %v707, 0
    %v711 = vld [vmem:[%s8] sm:$0x1]
    %v713 = vperm.slane %v711, 0
    %v715 = vsel %vm71, %v697, 0
    %v718 = vsel %vm71, %v698, 0
    %720 = vmatpush.msra.mxu0 0.0
    %721 = vmatpush.msra.mxu0 0.0
    %722 = vmatpush.msra.mxu0 0.0
    %723 = vmatpush.msra.mxu0 0.0
    %724 = vmatpush.msra.mxu0 0.0
    %725 = vmatpush.msra.mxu0 0.0
    %726 = vmatpush.msra.mxu0 0.0
    %727 = vmatpush.msra.mxu0 0.0
    %728 = vmatpush.msra.mxu0 0.0
    %729 = vmatpush.msra.mxu0 0.0
    %730 = vmatpush.msra.mxu0 0.0
    %731 = vmatpush.msra.mxu0 0.0
    %732 = vmatpush.msra.mxu0 %v702
    %733 = vmatpush.msra.mxu0 %v701
    %734 = vmatpush.msra.mxu0 %v700
    %735 = vmatpush.msra.mxu0 %v699
    %736 = vmatmul.f32.gmra.mxu0 %v715
    %v737 = vpop.f32.mrf.mxu0
    %v738 = vadd.f32 %v709, %v737
    %739 = vmatmul.f32.gmra.mxu0 %v718
    %v740 = vpop.f32.mrf.mxu0
    %v741 = vadd.f32 %v709, %v740
    %742 = vdwg.mxu0
    %743 = vmatpush.msra.mxu0 0.0
    %744 = vmatpush.msra.mxu0 0.0
    %745 = vmatpush.msra.mxu0 0.0
    %746 = vmatpush.msra.mxu0 0.0
    %747 = vmatpush.msra.mxu0 0.0
    %748 = vmatpush.msra.mxu0 0.0
    %749 = vmatpush.msra.mxu0 0.0
    %750 = vmatpush.msra.mxu0 0.0
    %751 = vmatpush.msra.mxu0 0.0
    %752 = vmatpush.msra.mxu0 0.0
    %753 = vmatpush.msra.mxu0 0.0
    %754 = vmatpush.msra.mxu0 0.0
    %755 = vmatpush.msra.mxu0 %v706
    %756 = vmatpush.msra.mxu0 %v705
    %757 = vmatpush.msra.mxu0 %v704
    %758 = vmatpush.msra.mxu0 %v703
    %759 = vmatmul.f32.gmra.mxu0 %v102
    %v760 = vpop.f32.mrf.mxu0
    %v761 = vadd.f32 0.0, %v760
    %762 = vdwg.mxu0
    %v763 = vadd.f32 %v738, %v761
    %v764 = vxor.u32 %v763, 2147483648
    %v765 = vmul.f32 %v764, 1.442695
    %v766 = vpow.pop %v765
    %v767 = vadd.f32 %v766, 1.0
    %v768 = vrcp.pop %v767
    %v769 = vmul.f32 %v767, %v768
    %v770 = vsub.f32 1.0, %v769
    %v771 = vmul.f32 %v768, %v770
    %v772 = vadd.f32 %v768, %v771
    %vm773 = vweird.f32 %v767
    %vm774 = vweird.f32 %v768
    %vm775 = vmor %vm773, %vm774
    %v776 = vsel %vm775, %v768, %v772
    %v777 = vand.u32 2147483647, %v767
    %vm778 = vcmp.eq.f32.partialorder %v777, 8.507059e+37
    %v779 = vand.u32 %v767, 2147483648
    %v780 = vor.u32 1.1754944e-38, %v779
    %v781 = vsel %vm778, %v780, %v776
    %v782 = vmul.f32 1.0, %v781
    %783 = vrot.lane.b32.xlu0 %v713, 64
    %v784 = vpop.permute.xlu0 %783
    %v786 = vadd.f32 %v761, %v784
    %788 = vrot.lane.b32.xlu0 %v786, 64
    %v789 = vpop.permute.xlu0 %788
    %v791 = vmul.f32 %v782, %v789
    %793 = vrot.lane.b32.xlu0 %v791, 64
    %v794 = vpop.permute.xlu0 %793
    %v796 = vadd.f32 %v738, %v794
    %v797 = vtanh.pop %v796
    %v798 = vsub.f32 1.0, %v782
    %800 = vrot.lane.b32.xlu0 %v797, 96
    %v801 = vpop.permute.xlu0 %800
    %v803 = vmul.f32 %v798, %v801
    %v804 = vmul.f32 %v782, 0.0
    %v805 = vadd.f32 %v803, %v804
    %807 = vrot.lane.b32.xlu0 %v805, 96
    %v808 = vpop.permute.xlu0 %807
    %810 = vst.msk [vmem:[#allocation2] sm:$0x3] %vm171, %v808
    %v811 = vsel %vm71, %v808, 0
    %813 = vmatpush.msra.mxu0 0.0
    %814 = vmatpush.msra.mxu0 0.0
    %815 = vmatpush.msra.mxu0 0.0
    %816 = vmatpush.msra.mxu0 0.0
    %817 = vmatpush.msra.mxu0 0.0
    %818 = vmatpush.msra.mxu0 0.0
    %819 = vmatpush.msra.mxu0 0.0
    %820 = vmatpush.msra.mxu0 0.0
    %821 = vmatpush.msra.mxu0 0.0
    %822 = vmatpush.msra.mxu0 0.0
    %823 = vmatpush.msra.mxu0 0.0
    %824 = vmatpush.msra.mxu0 0.0
    %825 = vmatpush.msra.mxu0 %v706
    %826 = vmatpush.msra.mxu0 %v705
    %827 = vmatpush.msra.mxu0 %v704
    %828 = vmatpush.msra.mxu0 %v703
    %829 = vmatmul.f32.gmra.mxu0 %v811
    %v830 = vpop.f32.mrf.mxu0
    %v831 = vadd.f32 0.0, %v830
    %832 = vdwg.mxu0
    %v834 = vrot.slane %v831, 6
    %v836 = vadd.f32 %v738, %v834
    %v837 = vxor.u32 %v836, 2147483648
    %v838 = vmul.f32 %v837, 1.442695
    %v839 = vpow.pop %v838
    %v840 = vadd.f32 %v839, 1.0
    %v841 = vrcp.pop %v840
    %v842 = vmul.f32 %v840, %v841
    %v843 = vsub.f32 1.0, %v842
    %v844 = vmul.f32 %v841, %v843
    %v845 = vadd.f32 %v841, %v844
    %vm846 = vweird.f32 %v840
    %vm847 = vweird.f32 %v841
    %vm848 = vmor %vm846, %vm847
    %v849 = vsel %vm848, %v841, %v845
    %v850 = vand.u32 2147483647, %v840
    %vm851 = vcmp.eq.f32.partialorder %v850, 8.507059e+37
    %v852 = vand.u32 %v840, 2147483648
    %v853 = vor.u32 1.1754944e-38, %v852
    %v854 = vsel %vm851, %v853, %v849
    %v855 = vmul.f32 1.0, %v854
    %v856 = vadd.f32 %v831, %v784
    %v858 = vrot.slane %v856, 6
    %859 = vrot.lane.b32.xlu0 %v858, 64
    %v860 = vpop.permute.xlu0 %859
    %v862 = vmul.f32 %v855, %v860
    %864 = vrot.lane.b32.xlu0 %v862, 64
    %v865 = vpop.permute.xlu0 %864
    %v867 = vadd.f32 %v738, %v865
    %v868 = vtanh.pop %v867
    %v869 = vsub.f32 1.0, %v855
    %871 = vrot.lane.b32.xlu0 %v868, 96
    %v872 = vpop.permute.xlu0 %871
    %v874 = vmul.f32 %v869, %v872
    %v875 = vrot.slane %v805, 6
    %v877 = vmul.f32 %v855, %v875
    %v878 = vadd.f32 %v874, %v877
    %880 = vrot.lane.b32.xlu0 %v878, 96
    %v881 = vpop.permute.xlu0 %880
    %883 = vst.msk [vmem:[#allocation2] sm:$0xc] %vm245, %v881
    %v884 = vrot.slane %v878, 2
    %885 = vrot.lane.b32.xlu0 %v884, 96
    %v886 = vpop.permute.xlu0 %885
    %v887 = vsel %vm71, %v886, 0
    %889 = vmatpush.msra.mxu0 0.0
    %890 = vmatpush.msra.mxu0 0.0
    %891 = vmatpush.msra.mxu0 0.0
    %892 = vmatpush.msra.mxu0 0.0
    %893 = vmatpush.msra.mxu0 0.0
    %894 = vmatpush.msra.mxu0 0.0
    %895 = vmatpush.msra.mxu0 0.0
    %896 = vmatpush.msra.mxu0 0.0
    %897 = vmatpush.msra.mxu0 0.0
    %898 = vmatpush.msra.mxu0 0.0
    %899 = vmatpush.msra.mxu0 0.0
    %900 = vmatpush.msra.mxu0 0.0
    %901 = vmatpush.msra.mxu0 %v706
    %902 = vmatpush.msra.mxu0 %v705
    %903 = vmatpush.msra.mxu0 %v704
    %904 = vmatpush.msra.mxu0 %v703
    %905 = vmatmul.f32.gmra.mxu0 %v887
    %v906 = vpop.f32.mrf.mxu0
    %v907 = vadd.f32 0.0, %v906
    %908 = vdwg.mxu0
    %v910 = vrot.slane %v907, 4
    %v912 = vadd.f32 %v738, %v910
    %v913 = vxor.u32 %v912, 2147483648
    %v914 = vmul.f32 %v913, 1.442695
    %v915 = vpow.pop %v914
    %v916 = vadd.f32 %v915, 1.0
    %v917 = vrcp.pop %v916
    %v918 = vmul.f32 %v916, %v917
    %v919 = vsub.f32 1.0, %v918
    %v920 = vmul.f32 %v917, %v919
    %v921 = vadd.f32 %v917, %v920
    %vm922 = vweird.f32 %v916
    %vm923 = vweird.f32 %v917
    %vm924 = vmor %vm922, %vm923
    %v925 = vsel %vm924, %v917, %v921
    %v926 = vand.u32 2147483647, %v916
    %vm927 = vcmp.eq.f32.partialorder %v926, 8.507059e+37
    %v928 = vand.u32 %v916, 2147483648
    %v929 = vor.u32 1.1754944e-38, %v928
    %v930 = vsel %vm927, %v929, %v925
    %v931 = vmul.f32 1.0, %v930
    %v932 = vadd.f32 %v907, %v784
    %v934 = vrot.slane %v932, 4
    %935 = vrot.lane.b32.xlu0 %v934, 64
    %v936 = vpop.permute.xlu0 %935
    %v938 = vmul.f32 %v931, %v936
    %940 = vrot.lane.b32.xlu0 %v938, 64
    %v941 = vpop.permute.xlu0 %940
    %v943 = vadd.f32 %v738, %v941
    %v944 = vtanh.pop %v943
    %v945 = vsub.f32 1.0, %v931
    %947 = vrot.lane.b32.xlu0 %v944, 96
    %v948 = vpop.permute.xlu0 %947
    %v950 = vmul.f32 %v945, %v948
    %v951 = vrot.slane %v878, 6
    %v953 = vmul.f32 %v931, %v951
    %v954 = vadd.f32 %v950, %v953
    %956 = vrot.lane.b32.xlu0 %v954, 96
    %v957 = vpop.permute.xlu0 %956
    %959 = vst.msk [vmem:[#allocation2] sm:$0x30] %vm322, %v957
    %v960 = vrot.slane %v954, 4
    %961 = vrot.lane.b32.xlu0 %v960, 96
    %v962 = vpop.permute.xlu0 %961
    %v963 = vsel %vm71, %v962, 0
    %965 = vmatpush.msra.mxu0 0.0
    %966 = vmatpush.msra.mxu0 0.0
    %967 = vmatpush.msra.mxu0 0.0
    %968 = vmatpush.msra.mxu0 0.0
    %969 = vmatpush.msra.mxu0 0.0
    %970 = vmatpush.msra.mxu0 0.0
    %971 = vmatpush.msra.mxu0 0.0
    %972 = vmatpush.msra.mxu0 0.0
    %973 = vmatpush.msra.mxu0 0.0
    %974 = vmatpush.msra.mxu0 0.0
    %975 = vmatpush.msra.mxu0 0.0
    %976 = vmatpush.msra.mxu0 0.0
    %977 = vmatpush.msra.mxu0 %v706
    %978 = vmatpush.msra.mxu0 %v705
    %979 = vmatpush.msra.mxu0 %v704
    %980 = vmatpush.msra.mxu0 %v703
    %981 = vmatmul.f32.gmra.mxu0 %v963
    %v982 = vpop.f32.mrf.mxu0
    %v983 = vadd.f32 0.0, %v982
    %984 = vdwg.mxu0
    %v986 = vrot.slane %v983, 2
    %v988 = vadd.f32 %v738, %v986
    %v989 = vxor.u32 %v988, 2147483648
    %v990 = vmul.f32 %v989, 1.442695
    %v991 = vpow.pop %v990
    %v992 = vadd.f32 %v991, 1.0
    %v993 = vrcp.pop %v992
    %v994 = vmul.f32 %v992, %v993
    %v995 = vsub.f32 1.0, %v994
    %v996 = vmul.f32 %v993, %v995
    %v997 = vadd.f32 %v993, %v996
    %vm998 = vweird.f32 %v992
    %vm999 = vweird.f32 %v993
    %vm1000 = vmor %vm998, %vm999
    %v1001 = vsel %vm1000, %v993, %v997
    %v1002 = vand.u32 2147483647, %v992
    %vm1003 = vcmp.eq.f32.partialorder %v1002, 8.507059e+37
    %v1004 = vand.u32 %v992, 2147483648
    %v1005 = vor.u32 1.1754944e-38, %v1004
    %v1006 = vsel %vm1003, %v1005, %v1001
    %v1007 = vmul.f32 1.0, %v1006
    %v1008 = vadd.f32 %v983, %v784
    %v1010 = vrot.slane %v1008, 2
    %1011 = vrot.lane.b32.xlu0 %v1010, 64
    %v1012 = vpop.permute.xlu0 %1011
    %v1014 = vmul.f32 %v1007, %v1012
    %1016 = vrot.lane.b32.xlu0 %v1014, 64
    %v1017 = vpop.permute.xlu0 %1016
    %v1019 = vadd.f32 %v738, %v1017
    %v1020 = vtanh.pop %v1019
    %v1021 = vsub.f32 1.0, %v1007
    %1023 = vrot.lane.b32.xlu0 %v1020, 96
    %v1024 = vpop.permute.xlu0 %1023
    %v1026 = vmul.f32 %v1021, %v1024
    %v1027 = vrot.slane %v954, 6
    %v1029 = vmul.f32 %v1007, %v1027
    %v1030 = vadd.f32 %v1026, %v1029
    %1032 = vrot.lane.b32.xlu0 %v1030, 96
    %v1033 = vpop.permute.xlu0 %1032
    %1035 = vst.msk [vmem:[#allocation2] sm:$0xc0] %vm399, %v1033
    %v1036 = vrot.slane %v1030, 6
    %1037 = vrot.lane.b32.xlu0 %v1036, 96
    %v1038 = vpop.permute.xlu0 %1037
    %v1039 = vsel %vm71, %v1038, 0
    %1041 = vmatpush.msra.mxu0 0.0
    %1042 = vmatpush.msra.mxu0 0.0
    %1043 = vmatpush.msra.mxu0 0.0
    %1044 = vmatpush.msra.mxu0 0.0
    %1045 = vmatpush.msra.mxu0 0.0
    %1046 = vmatpush.msra.mxu0 0.0
    %1047 = vmatpush.msra.mxu0 0.0
    %1048 = vmatpush.msra.mxu0 0.0
    %1049 = vmatpush.msra.mxu0 0.0
    %1050 = vmatpush.msra.mxu0 0.0
    %1051 = vmatpush.msra.mxu0 0.0
    %1052 = vmatpush.msra.mxu0 0.0
    %1053 = vmatpush.msra.mxu0 %v706
    %1054 = vmatpush.msra.mxu0 %v705
    %1055 = vmatpush.msra.mxu0 %v704
    %1056 = vmatpush.msra.mxu0 %v703
    %1057 = vmatmul.f32.gmra.mxu0 %v1039
    %v1058 = vpop.f32.mrf.mxu0
    %v1059 = vadd.f32 0.0, %v1058
    %1060 = vdwg.mxu0
    %v1061 = vadd.f32 %v741, %v1059
    %v1062 = vxor.u32 %v1061, 2147483648
    %v1063 = vmul.f32 %v1062, 1.442695
    %v1064 = vpow.pop %v1063
    %v1065 = vadd.f32 %v1064, 1.0
    %v1066 = vrcp.pop %v1065
    %v1067 = vmul.f32 %v1065, %v1066
    %v1068 = vsub.f32 1.0, %v1067
    %v1069 = vmul.f32 %v1066, %v1068
    %v1070 = vadd.f32 %v1066, %v1069
    %vm1071 = vweird.f32 %v1065
    %vm1072 = vweird.f32 %v1066
    %vm1073 = vmor %vm1071, %vm1072
    %v1074 = vsel %vm1073, %v1066, %v1070
    %v1075 = vand.u32 2147483647, %v1065
    %vm1076 = vcmp.eq.f32.partialorder %v1075, 8.507059e+37
    %v1077 = vand.u32 %v1065, 2147483648
    %v1078 = vor.u32 1.1754944e-38, %v1077
    %v1079 = vsel %vm1076, %v1078, %v1074
    %v1080 = vmul.f32 1.0, %v1079
    %v1081 = vadd.f32 %v1059, %v784
    %1083 = vrot.lane.b32.xlu0 %v1081, 64
    %v1084 = vpop.permute.xlu0 %1083
    %v1086 = vmul.f32 %v1080, %v1084
    %1088 = vrot.lane.b32.xlu0 %v1086, 64
    %v1089 = vpop.permute.xlu0 %1088
    %v1091 = vadd.f32 %v741, %v1089
    %v1092 = vtanh.pop %v1091
    %v1093 = vsub.f32 1.0, %v1080
    %1095 = vrot.lane.b32.xlu0 %v1092, 96
    %v1096 = vpop.permute.xlu0 %1095
    %v1098 = vmul.f32 %v1093, %v1096
    %v1100 = vmul.f32 %v1080, %v1036
    %v1101 = vadd.f32 %v1098, %v1100
    %1103 = vrot.lane.b32.xlu0 %v1101, 96
    %v1104 = vpop.permute.xlu0 %1103
    %1106 = vst.msk [vmem:[#allocation2 + $0x8] sm:$0x3] %vm171, %v1104
    %v1107 = vsel %vm71, %v1104, 0
    %1109 = vmatpush.msra.mxu0 0.0
    %1110 = vmatpush.msra.mxu0 0.0
    %1111 = vmatpush.msra.mxu0 0.0
    %1112 = vmatpush.msra.mxu0 0.0
    %1113 = vmatpush.msra.mxu0 0.0
    %1114 = vmatpush.msra.mxu0 0.0
    %1115 = vmatpush.msra.mxu0 0.0
    %1116 = vmatpush.msra.mxu0 0.0
    %1117 = vmatpush.msra.mxu0 0.0
    %1118 = vmatpush.msra.mxu0 0.0
    %1119 = vmatpush.msra.mxu0 0.0
    %1120 = vmatpush.msra.mxu0 0.0
    %1121 = vmatpush.msra.mxu0 %v706
    %1122 = vmatpush.msra.mxu0 %v705
    %1123 = vmatpush.msra.mxu0 %v704
    %1124 = vmatpush.msra.mxu0 %v703
    %1125 = vmatmul.f32.gmra.mxu0 %v1107
    %v1126 = vpop.f32.mrf.mxu0
    %v1127 = vadd.f32 0.0, %v1126
    %1128 = vdwg.mxu0
    %v1130 = vrot.slane %v1127, 6
    %v1132 = vadd.f32 %v741, %v1130
    %v1133 = vxor.u32 %v1132, 2147483648
    %v1134 = vmul.f32 %v1133, 1.442695
    %v1135 = vpow.pop %v1134
    %v1136 = vadd.f32 %v1135, 1.0
    %v1137 = vrcp.pop %v1136
    %v1138 = vmul.f32 %v1136, %v1137
    %v1139 = vsub.f32 1.0, %v1138
    %v1140 = vmul.f32 %v1137, %v1139
    %v1141 = vadd.f32 %v1137, %v1140
    %vm1142 = vweird.f32 %v1136
    %vm1143 = vweird.f32 %v1137
    %vm1144 = vmor %vm1142, %vm1143
    %v1145 = vsel %vm1144, %v1137, %v1141
    %v1146 = vand.u32 2147483647, %v1136
    %vm1147 = vcmp.eq.f32.partialorder %v1146, 8.507059e+37
    %v1148 = vand.u32 %v1136, 2147483648
    %v1149 = vor.u32 1.1754944e-38, %v1148
    %v1150 = vsel %vm1147, %v1149, %v1145
    %v1151 = vmul.f32 1.0, %v1150
    %v1152 = vadd.f32 %v1127, %v784
    %v1154 = vrot.slane %v1152, 6
    %1155 = vrot.lane.b32.xlu0 %v1154, 64
    %v1156 = vpop.permute.xlu0 %1155
    %v1158 = vmul.f32 %v1151, %v1156
    %1160 = vrot.lane.b32.xlu0 %v1158, 64
    %v1161 = vpop.permute.xlu0 %1160
    %v1163 = vadd.f32 %v741, %v1161
    %v1164 = vtanh.pop %v1163
    %v1165 = vsub.f32 1.0, %v1151
    %1167 = vrot.lane.b32.xlu0 %v1164, 96
    %v1168 = vpop.permute.xlu0 %1167
    %v1170 = vmul.f32 %v1165, %v1168
    %v1171 = vrot.slane %v1101, 6
    %v1173 = vmul.f32 %v1151, %v1171
    %v1174 = vadd.f32 %v1170, %v1173
    %1176 = vrot.lane.b32.xlu0 %v1174, 96
    %v1177 = vpop.permute.xlu0 %1176
    %1179 = vst.msk [vmem:[#allocation2 + $0x8] sm:$0xc] %vm245, %v1177
    %v1180 = vrot.slane %v1174, 2
    %1181 = vrot.lane.b32.xlu0 %v1180, 96
    %v1182 = vpop.permute.xlu0 %1181
    %v1183 = vsel %vm71, %v1182, 0
    %1185 = vmatpush.msra.mxu0 0.0
    %1186 = vmatpush.msra.mxu0 0.0
    %1187 = vmatpush.msra.mxu0 0.0
    %1188 = vmatpush.msra.mxu0 0.0
    %1189 = vmatpush.msra.mxu0 0.0
    %1190 = vmatpush.msra.mxu0 0.0
    %1191 = vmatpush.msra.mxu0 0.0
    %1192 = vmatpush.msra.mxu0 0.0
    %1193 = vmatpush.msra.mxu0 0.0
    %1194 = vmatpush.msra.mxu0 0.0
    %1195 = vmatpush.msra.mxu0 0.0
    %1196 = vmatpush.msra.mxu0 0.0
    %1197 = vmatpush.msra.mxu0 %v706
    %1198 = vmatpush.msra.mxu0 %v705
    %1199 = vmatpush.msra.mxu0 %v704
    %1200 = vmatpush.msra.mxu0 %v703
    %1201 = vmatmul.f32.gmra.mxu0 %v1183
    %v1202 = vpop.f32.mrf.mxu0
    %v1203 = vadd.f32 0.0, %v1202
    %1204 = vdwg.mxu0
    %v1206 = vrot.slane %v1203, 4
    %v1208 = vadd.f32 %v741, %v1206
    %v1209 = vxor.u32 %v1208, 2147483648
    %v1210 = vmul.f32 %v1209, 1.442695
    %v1211 = vpow.pop %v1210
    %v1212 = vadd.f32 %v1211, 1.0
    %v1213 = vrcp.pop %v1212
    %v1214 = vmul.f32 %v1212, %v1213
    %v1215 = vsub.f32 1.0, %v1214
    %v1216 = vmul.f32 %v1213, %v1215
    %v1217 = vadd.f32 %v1213, %v1216
    %vm1218 = vweird.f32 %v1212
    %vm1219 = vweird.f32 %v1213
    %vm1220 = vmor %vm1218, %vm1219
    %v1221 = vsel %vm1220, %v1213, %v1217
    %v1222 = vand.u32 2147483647, %v1212
    %vm1223 = vcmp.eq.f32.partialorder %v1222, 8.507059e+37
    %v1224 = vand.u32 %v1212, 2147483648
    %v1225 = vor.u32 1.1754944e-38, %v1224
    %v1226 = vsel %vm1223, %v1225, %v1221
    %v1227 = vmul.f32 1.0, %v1226
    %v1228 = vadd.f32 %v1203, %v784
    %v1230 = vrot.slane %v1228, 4
    %1231 = vrot.lane.b32.xlu0 %v1230, 64
    %v1232 = vpop.permute.xlu0 %1231
    %v1234 = vmul.f32 %v1227, %v1232
    %1236 = vrot.lane.b32.xlu0 %v1234, 64
    %v1237 = vpop.permute.xlu0 %1236
    %v1239 = vadd.f32 %v741, %v1237
    %v1240 = vtanh.pop %v1239
    %v1241 = vsub.f32 1.0, %v1227
    %1243 = vrot.lane.b32.xlu0 %v1240, 96
    %v1244 = vpop.permute.xlu0 %1243
    %v1246 = vmul.f32 %v1241, %v1244
    %v1247 = vrot.slane %v1174, 6
    %v1249 = vmul.f32 %v1227, %v1247
    %v1250 = vadd.f32 %v1246, %v1249
    %1252 = vrot.lane.b32.xlu0 %v1250, 96
    %v1253 = vpop.permute.xlu0 %1252
    %1255 = vst.msk [vmem:[#allocation2 + $0x8] sm:$0x30] %vm322, %v1253
    %v1256 = vrot.slane %v1250, 4
    %1257 = vrot.lane.b32.xlu0 %v1256, 96
    %v1258 = vpop.permute.xlu0 %1257
    %v1259 = vsel %vm71, %v1258, 0
    %1261 = vmatpush.msra.mxu0 0.0
    %1262 = vmatpush.msra.mxu0 0.0
    %1263 = vmatpush.msra.mxu0 0.0
    %1264 = vmatpush.msra.mxu0 0.0
    %1265 = vmatpush.msra.mxu0 0.0
    %1266 = vmatpush.msra.mxu0 0.0
    %1267 = vmatpush.msra.mxu0 0.0
    %1268 = vmatpush.msra.mxu0 0.0
    %1269 = vmatpush.msra.mxu0 0.0
    %1270 = vmatpush.msra.mxu0 0.0
    %1271 = vmatpush.msra.mxu0 0.0
    %1272 = vmatpush.msra.mxu0 0.0
    %1273 = vmatpush.msra.mxu0 %v706
    %1274 = vmatpush.msra.mxu0 %v705
    %1275 = vmatpush.msra.mxu0 %v704
    %1276 = vmatpush.msra.mxu0 %v703
    %1277 = vmatmul.f32.gmra.mxu0 %v1259
    %v1278 = vpop.f32.mrf.mxu0
    %v1279 = vadd.f32 0.0, %v1278
    %1280 = vdwg.mxu0
    %v1282 = vrot.slane %v1279, 2
    %v1284 = vadd.f32 %v741, %v1282
    %v1285 = vxor.u32 %v1284, 2147483648
    %v1286 = vmul.f32 %v1285, 1.442695
    %v1287 = vpow.pop %v1286
    %v1288 = vadd.f32 %v1287, 1.0
    %v1289 = vrcp.pop %v1288
    %v1290 = vmul.f32 %v1288, %v1289
    %v1291 = vsub.f32 1.0, %v1290
    %v1292 = vmul.f32 %v1289, %v1291
    %v1293 = vadd.f32 %v1289, %v1292
    %vm1294 = vweird.f32 %v1288
    %vm1295 = vweird.f32 %v1289
    %vm1296 = vmor %vm1294, %vm1295
    %v1297 = vsel %vm1296, %v1289, %v1293
    %v1298 = vand.u32 2147483647, %v1288
    %vm1299 = vcmp.eq.f32.partialorder %v1298, 8.507059e+37
    %v1300 = vand.u32 %v1288, 2147483648
    %v1301 = vor.u32 1.1754944e-38, %v1300
    %v1302 = vsel %vm1299, %v1301, %v1297
    %v1303 = vmul.f32 1.0, %v1302
    %v1304 = vadd.f32 %v1279, %v784
    %v1306 = vrot.slane %v1304, 2
    %1307 = vrot.lane.b32.xlu0 %v1306, 64
    %v1308 = vpop.permute.xlu0 %1307
    %v1310 = vmul.f32 %v1303, %v1308
    %1312 = vrot.lane.b32.xlu0 %v1310, 64
    %v1313 = vpop.permute.xlu0 %1312
    %v1315 = vadd.f32 %v741, %v1313
    %v1316 = vtanh.pop %v1315
    %v1317 = vsub.f32 1.0, %v1303
    %1319 = vrot.lane.b32.xlu0 %v1316, 96
    %v1320 = vpop.permute.xlu0 %1319
    %v1322 = vmul.f32 %v1317, %v1320
    %v1323 = vrot.slane %v1250, 6
    %v1325 = vmul.f32 %v1303, %v1323
    %v1326 = vadd.f32 %v1322, %v1325
    %1328 = vrot.lane.b32.xlu0 %v1326, 96
    %v1329 = vpop.permute.xlu0 %1328
    %1331 = vst.msk [vmem:[#allocation2 + $0x8] sm:$0xc0] %vm399, %v1329
    %v1332 = vld [vmem:[#allocation2] sm:$0xff]
    %v1333 = vld [vmem:[#allocation2 + $0x8] sm:$0xff]
    %v1334 = vld [vmem:[%s9] sm:$0xff]
    %v1335 = vld [vmem:[%s9 + $0x8] sm:$0xff]
    %v1336 = vld [vmem:[%s9 + $0x10] sm:$0xff]
    %v1337 = vld [vmem:[%s9 + $0x18] sm:$0xff]
    %v1338 = vld [vmem:[%s10] sm:$0x1]
    %v1340 = vperm.slane %v1338, 0
    %v1343 = vsel %vm71, %v1332, 0
    %v1346 = vsel %vm71, %v1333, 0
    %1348 = vmatpush.msra.mxu0 0.0
    %1349 = vmatpush.msra.mxu0 0.0
    %1350 = vmatpush.msra.mxu0 0.0
    %1351 = vmatpush.msra.mxu0 0.0
    %1352 = vmatpush.msra.mxu0 0.0
    %1353 = vmatpush.msra.mxu0 0.0
    %1354 = vmatpush.msra.mxu0 0.0
    %1355 = vmatpush.msra.mxu0 0.0
    %1356 = vmatpush.msra.mxu0 0.0
    %1357 = vmatpush.msra.mxu0 0.0
    %1358 = vmatpush.msra.mxu0 0.0
    %1359 = vmatpush.msra.mxu0 0.0
    %1360 = vmatpush.msra.mxu0 %v1337
    %1361 = vmatpush.msra.mxu0 %v1336
    %1362 = vmatpush.msra.mxu0 %v1335
    %1363 = vmatpush.msra.mxu0 %v1334
    %1364 = vmatmul.f32.gmra.mxu0 %v1343
    %v1365 = vpop.f32.mrf.mxu0
    %v1366 = vadd.f32 %v1340, %v1365
    %1367 = vmatmul.f32.gmra.mxu0 %v1346
    %v1368 = vpop.f32.mrf.mxu0
    %v1369 = vadd.f32 %v1340, %v1368
    %1370 = vdwg.mxu0
    %vm1371 = vcmask 31744
    %1372 = vst.msk [vmem:[%s11] sm:$0xff] %vm1371, %v1366
    %1373 = vst.msk [vmem:[%s11 + $0x8] sm:$0xff] %vm1371, %v1369
    // Predicated region
    $region50: #{fwd.1} parent=1 // pred_check
      _
    $region51: #{fwd.1} parent=1 // pred_check_branch
      %1375 = sbr.rel (0) target = $region53
    $region52: #{fwd.1} parent=1 // pred_region
      _
    $region53: #{fwd.1} parent=1 // pred_fallthru
      _
    // Predicated region
    $region54: #{fwd.1} parent=1 // pred_check
      _
    $region55: #{fwd.1} parent=1 // pred_check_branch
      %1377 = sbr.rel (0) target = $region57
    $region56: #{fwd.1} parent=1 // pred_region
      _
    $region57: #{fwd.1} parent=1 // pred_fallthru
      _
    %1378 = vsyncpa [#allocation4], 1

</llo_original>
